<compile_context>
chip_gen: v5e
topology: v5e:2x2
jax: 0.10.0
libtpu: 0.0.40
codegen_flags: <defaults>
</compile_context>

<pallas_src>
import functools

import jax
import jax.numpy as jnp
from jax import lax
from jax.experimental import pallas as pl
from jax.experimental.pallas import tpu as pltpu


def _elu(x):
    # ELU(alpha=1), same formula used in the kernel and the reference.
    # TODO(synk): needs a custom VJP (exp only on the negative branch) before differentiating.
    return jnp.where(x > 0.0, x, jnp.exp(x) - 1.0)


def _is_pow2(n):
    return n > 0 and (n & (n - 1)) == 0


# ----------------------------------------------------------------------------
# The single fused kernel.
# Slab layout: rows (sublanes) = N*H, lanes = W*C.
# ----------------------------------------------------------------------------
def _impala_kernel(x_ref, w0_ref, a0_ref, rsel_ref, csel_ref,
                   w1_ref, a1_ref, w2_ref, a2_ref,
                   w3_ref, a3_ref, w4_ref, a4_ref, o_ref,
                   *, N, H, W, Ho, Wo, Cin, Cout, eps, use_bn):
    f32 = jnp.float32
    NH, NHo = N * H, N * Ho

    def row_masks(rows, Hd):
        # Which slab rows have a valid neighbour above / below inside the same image.
        h = lax.broadcasted_iota(jnp.int32, (rows, 1), 0) % Hd
        return h != 0, h != (Hd - 1)

    up_ok_h, dn_ok_h = row_masks(NH, H)       # pre-pool slabs  (N*H rows)
    up_ok_p, dn_ok_p = row_masks(NHo, Ho)     # post-pool slabs (N*Ho rows)

    def shift_rows(x, delta):
        # result[r] = x[r + delta] (cyclic); caller masks the invalid boundary rows.
        return pltpu.roll(x, shift=(-delta) % x.shape[0], axis=0)

    def shift_lanes(x, delta):
        return pltpu.roll(x, shift=(-delta) % x.shape[1], axis=1)

    def conv3x3(x, w_ref, up_ok, dn_ok):
        # 3x3 "same" conv as ONE MXU matmul over the whole slab:
        #   LHS = [row h-1 | row h | row h+1] along lanes  (K = 3 * W * Cin)
        #   RHS = banded weights stacked along K (W-padding folded into the band).
        # Vertical "same" padding = XLU roll + zero boundary-row mask (no copies).
        x_up = jnp.where(up_ok, shift_rows(x, -1), 0.0)
        x_dn = jnp.where(dn_ok, shift_rows(x, +1), 0.0)
        lhs = jnp.concatenate([x_up, x, x_dn], axis=1)
        return jnp.dot(lhs, w_ref[...], preferred_element_type=f32)

    def channel_allreduce(row, width):
        # Sum the width//Cout lane groups of a (1, width) row into per-channel
        # totals replicated into every lane group, using an XLU roll doubling tree
        # (no MXU M=1 reduction matmul).  Rows narrower than 128 lanes are
        # zero-padded so the rotation width is a lane-tile multiple.
        pad = (-width) % 128
        if pad:
            row = jnp.concatenate([row, jnp.zeros((1, pad), f32)], axis=1)
        padded = width + pad
        assert padded % Cout == 0 and _is_pow2(padded // Cout), (
            "roll-tree channel reduce needs a power-of-two lane-group count")
        amt = Cout
        while amt < padded:
            row = row + pltpu.roll(row, shift=amt, axis=1)
            amt *= 2
        return row[:, :width]

    def conv_block(x, w_ref, a_ref, up_ok, dn_ok, rows, Wd):
        # [conv3x3] -> [BatchNorm (batch stats) | bias], fully in VMEM.
        acc = conv3x3(x, w_ref, up_ok, dn_ok)           # (rows, Wd*Cout) f32
        scale = a_ref[0:1, :]                           # (1, Wd*Cout) channel-tiled
        shift = a_ref[1:2, :]
        if not use_bn:
            return acc * scale + shift                  # scale = 1, shift = conv bias
        width = Wd * Cout
        # One reduce pass: sum and sum-of-squares (var = E[x^2] - mean^2, f32 stats).
        s1 = channel_allreduce(jnp.sum(acc, axis=0, keepdims=True), width)
        s2 = channel_allreduce(jnp.sum(acc * acc, axis=0, keepdims=True), width)
        inv = 1.0 / float(rows * Wd)                    # 1 / (N * H * W) per channel
        mean = s1 * inv
        var = s2 * inv - mean * mean                    # f32; conv outputs are ~zero-mean
        a = lax.rsqrt(var + eps) * scale
        b = shift - mean * a
        return acc * a + b                              # BN folded into one affine

    # ---------------- stem ConvBlock ----------------
    x = x_ref[...].astype(f32)
    y = conv_block(x, w0_ref, a0_ref, up_ok_h, dn_ok_h, NH, W)     # (N*H, W*Cout)

    # ---------------- MaxPool2d(kernel=3, stride=2, padding=1) ----------------
    NEG = f32(-3.0e38)        # stands in for -inf padding (PyTorch max-pool semantics)
    WCout = W * Cout
    up = jnp.where(up_ok_h, shift_rows(y, -1), NEG)                # row h-1
    dn = jnp.where(dn_ok_h, shift_rows(y, +1), NEG)                # row h+1
    v = jnp.maximum(jnp.maximum(up, y), dn)                        # vertical 3-max
    lane = lax.broadcasted_iota(jnp.int32, (1, WCout), 1)
    lft = jnp.where(lane >= Cout, shift_lanes(v, -Cout), NEG)      # col w-1
    rgt = jnp.where(lane < (W - 1) * Cout, shift_lanes(v, +Cout), NEG)  # col w+1
    d = jnp.maximum(jnp.maximum(lft, v), rgt)                      # 3x3 sliding max
    # Stride-2 selection: one block-diag rsel matmul + one csel matmul (exact 0/1).
    y = jnp.dot(jnp.dot(rsel_ref[...], d, preferred_element_type=f32),
                csel_ref[...], preferred_element_type=f32)         # (N*Ho, Wo*Cout)

    # ---------------- two residual blocks ----------------
    for w_a, a_a, w_b, a_b in ((w1_ref, a1_ref, w2_ref, a2_ref),
                               (w3_ref, a3_ref, w4_ref, a4_ref)):
        t = conv_block(_elu(y), w_a, a_a, up_ok_p, dn_ok_p, NHo, Wo)
        y = conv_block(_elu(t), w_b, a_b, up_ok_p, dn_ok_p, NHo, Wo) + y

    o_ref[...] = y.astype(o_ref.dtype)                             # single HBM store


# ----------------------------------------------------------------------------
# Parameter preprocessing (parameter-sized; in real use precomputed once).
# ----------------------------------------------------------------------------
def _banded_conv_weights(w_hwio, W):
    """(3, 3, Cin, Cout) -> (3*W*Cin, W*Cout): banded matrices for the three vertical
    taps, stacked along K in [h-1 | h | h+1] order (matches the kernel's LHS concat).

    B[kh][win*Cin+ci, wout*Cout+co] = w[kh, win-wout+1, ci, co] inside the band,
    0 outside; "same" padding along W is implicit (out-of-range taps absent).
    TODO(synk): tile along W (block-tridiagonal band) at production W to avoid the
                O(W^2) zero-MAC and weight-VMEM blowup.
    """
    KH, KW, Cin, Cout = w_hwio.shape
    win = jnp.arange(W)[:, None]
    wout = jnp.arange(W)[None, :]
    kw = win - wout + (KW // 2)
    valid = ((kw >= 0) & (kw < KW)).astype(w_hwio.dtype)
    kw_c = jnp.clip(kw, 0, KW - 1)
    blocks = w_hwio[:, kw_c, :, :] * valid[None, :, :, None, None]  # (3, W, W, Cin, Cout)
    return blocks.transpose(0, 1, 3, 2, 4).reshape(KH * W * Cin, W * Cout)


def _affine_rows(p, W, use_bn):
    """Channel-tiled (2, W*Cout) [scale; shift] row pair for one ConvBlock."""
    if use_bn:
        scale, shift = p["gamma"], p["beta"]
    else:
        scale, shift = jnp.ones_like(p["b"]), p["b"]
    return jnp.stack([jnp.tile(scale.astype(jnp.float32), W),
                      jnp.tile(shift.astype(jnp.float32), W)], axis=0)


# ----------------------------------------------------------------------------
# ImpalaSequential forward (NCHW in / NCHW out, matching the PyTorch module)
# ----------------------------------------------------------------------------
@functools.partial(jax.jit, static_argnames=("use_bn",))
def impala_sequential_forward(x_nchw, params, use_bn=True):
    eps = 1e-5
    N, Cin, H, W = x_nchw.shape
    Cout = params["conv"]["w"].shape[-1]
    Ho, Wo = (H - 1) // 2 + 1, (W - 1) // 2 + 1

    # Layout change exactly once at entry: NCHW -> NHWC -> lane-dense slab (N*H, W*C).
    x = jnp.transpose(x_nchw, (0, 2, 3, 1)).reshape(N * H, W * Cin).astype(jnp.float32)

    w0 = _banded_conv_weights(params["conv"]["w"].astype(jnp.float32), W)
    a0 = _affine_rows(params["conv"], W, use_bn)
    res_w, res_a = [], []
    for blk in ("res1", "res2"):
        for cv in ("conv1", "conv2"):
            res_w.append(_banded_conv_weights(params[blk][cv]["w"].astype(jnp.float32), Wo))
            res_a.append(_affine_rows(params[blk][cv], Wo, use_bn))

    # MaxPool stride-2 selection matrices (constants under jit): block-diagonal row
    # selector over the whole slab and kron(wsel, I_C) lane-group selector.
    out_r = jnp.arange(N * Ho)
    src_r = (out_r // Ho) * H + 2 * (out_r % Ho)
    rsel = (jnp.arange(N * H)[None, :] == src_r[:, None]).astype(jnp.float32)
    wsel = (jnp.arange(W)[:, None] == 2 * jnp.arange(Wo)[None, :]).astype(jnp.float32)
    csel = jnp.kron(wsel, jnp.eye(Cout, dtype=jnp.float32))         # (W*Cout, Wo*Cout)

    kernel = functools.partial(
        _impala_kernel, N=N, H=H, W=W, Ho=Ho, Wo=Wo, Cin=Cin, Cout=Cout,
        eps=eps, use_bn=use_bn)

    inputs = [x, w0, a0, rsel, csel,
              res_w[0], res_a[0], res_w[1], res_a[1],
              res_w[2], res_a[2], res_w[3], res_a[3]]
    in_specs = [pl.BlockSpec(a.shape, lambda: (0, 0)) for a in inputs]

    out_slab = pl.pallas_call(
        kernel,
        out_shape=jax.ShapeDtypeStruct((N * Ho, Wo * Cout), jnp.float32),
        in_specs=in_specs,
        out_specs=pl.BlockSpec((N * Ho, Wo * Cout), lambda: (0, 0)),
    )(*inputs)

    # Layout change exactly once at exit: slab -> NHWC -> NCHW.
    return jnp.transpose(out_slab.reshape(N, Ho, Wo, Cout), (0, 3, 1, 2))


# ----------------------------------------------------------------------------
# Pure-JAX reference (for correctness check)
# ----------------------------------------------------------------------------
def impala_sequential_reference(x_nchw, params, use_bn=True, eps=1e-5):
    y = jnp.transpose(x_nchw, (0, 2, 3, 1))   # NHWC

    def conv_block(z, p):
        out = jax.lax.conv_general_dilated(
            z, p["w"], window_strides=(1, 1), padding="SAME",
            dimension_numbers=("NHWC", "HWIO", "NHWC"),
            precision=jax.lax.Precision.HIGHEST)
        if use_bn:
            mean = jnp.mean(out, axis=(0, 1, 2), keepdims=True)
            var = jnp.mean((out - mean) ** 2, axis=(0, 1, 2), keepdims=True)
            out = (out - mean) * jax.lax.rsqrt(var + eps)
            out = out * p["gamma"].reshape(1, 1, 1, -1) + p["beta"].reshape(1, 1, 1, -1)
        else:
            out = out + p["b"].reshape(1, 1, 1, -1)
        return out

    y = conv_block(y, params["conv"])
    y = jax.lax.reduce_window(y, -jnp.inf, jax.lax.max,
                              window_dimensions=(1, 3, 3, 1),
                              window_strides=(1, 2, 2, 1),
                              padding=((0, 0), (1, 1), (1, 1), (0, 0)))
    for blk in ("res1", "res2"):
        resid = y
        t = conv_block(_elu(y), params[blk]["conv1"])
        y = conv_block(_elu(t), params[blk]["conv2"]) + resid
    return jnp.transpose(y, (0, 3, 1, 2))


if __name__ == "__main__":
    key = jax.random.PRNGKey(0)
    keys = jax.random.split(key, 6)

    N, Cin, H, W = 2, 4, 16, 16
    Cout = 8

    x = jax.random.normal(keys[0], (N, Cin, H, W), jnp.float32)

    def make_conv_params(k, ci, co):
        k1, k2, k3, k4 = jax.random.split(k, 4)
        bound = 1.0 / float(ci * 9) ** 0.5
        return {
            "w": jax.random.uniform(k1, (3, 3, ci, co), jnp.float32, -bound, bound),
            "b": jax.random.uniform(k2, (co,), jnp.float32, -bound, bound),
            "gamma": jax.random.uniform(k3, (co,), jnp.float32, 0.5, 1.5),
            "beta": jax.random.uniform(k4, (co,), jnp.float32, -0.5, 0.5),
        }

    params = {
        "conv": make_conv_params(keys[1], Cin, Cout),
        "res1": {"conv1": make_conv_params(keys[2], Cout, Cout),
                 "conv2": make_conv_params(keys[3], Cout, Cout)},
        "res2": {"conv1": make_conv_params(keys[4], Cout, Cout),
                 "conv2": make_conv_params(keys[5], Cout, Cout)},
    }

    Ho, Wo = (H - 1) // 2 + 1, (W - 1) // 2 + 1
    for use_bn in (True, False):
        out = jax.block_until_ready(impala_sequential_forward(x, params, use_bn=use_bn))
        ref = jax.block_until_ready(impala_sequential_reference(x, params, use_bn=use_bn))
        assert out.shape == (N, Cout, Ho, Wo), out.shape
        max_err = float(jnp.max(jnp.abs(out - ref)))
        assert jnp.allclose(out, ref, atol=1e-3, rtol=1e-3), (
            f"mismatch (use_bn={use_bn}): max abs err {max_err}")

    print("KERNEL_OK")
</pallas_src>

<mosaic_0001>
module attributes {stable_mosaic.version = 11 : i64} {
  func.func @_impala_kernel(%arg0: memref<32x64xf32, #tpu.memory_space<vmem>>, %arg1: memref<192x128xf32, #tpu.memory_space<vmem>>, %arg2: memref<2x128xf32, #tpu.memory_space<vmem>>, %arg3: memref<16x32xf32, #tpu.memory_space<vmem>>, %arg4: memref<128x64xf32, #tpu.memory_space<vmem>>, %arg5: memref<192x64xf32, #tpu.memory_space<vmem>>, %arg6: memref<2x64xf32, #tpu.memory_space<vmem>>, %arg7: memref<192x64xf32, #tpu.memory_space<vmem>>, %arg8: memref<2x64xf32, #tpu.memory_space<vmem>>, %arg9: memref<192x64xf32, #tpu.memory_space<vmem>>, %arg10: memref<2x64xf32, #tpu.memory_space<vmem>>, %arg11: memref<192x64xf32, #tpu.memory_space<vmem>>, %arg12: memref<2x64xf32, #tpu.memory_space<vmem>>, %arg13: memref<16x64xf32, #tpu.memory_space<vmem>>) attributes {dimension_semantics = [], scalar_prefetch = 0 : i64, scratch_operands = 0 : i64, tpu.core_type = #tpu.core_type<tc>} {
    %0 = tpu.iota {dimensions = array<i32: 0>} : vector<32x1xi32>
    %c16_i32 = arith.constant 16 : i32
    %c0_i32 = arith.constant 0 : i32
    %1 = arith.cmpi eq, %c16_i32, %c0_i32 : i32
    %c1_i32 = arith.constant 1 : i32
    %2 = arith.select %1, %c1_i32, %c16_i32 : i32
    %3 = vector.broadcast %2 : i32 to vector<32x1xi32>
    %4 = arith.remsi %0, %3 : vector<32x1xi32>
    %c0_i32_0 = arith.constant 0 : i32
    %5 = vector.broadcast %c0_i32_0 : i32 to vector<32x1xi32>
    %6 = arith.cmpi ne, %4, %5 : vector<32x1xi32>
    %c0_i32_1 = arith.constant 0 : i32
    %7 = vector.broadcast %c0_i32_1 : i32 to vector<32x1xi32>
    %8 = arith.cmpi slt, %4, %7 : vector<32x1xi32>
    %c0_i32_2 = arith.constant 0 : i32
    %9 = arith.cmpi slt, %2, %c0_i32_2 : i32
    %10 = vector.broadcast %9 : i1 to vector<32x1xi1>
    %11 = vector.broadcast %10 : vector<32x1xi1> to vector<32x1xi1>
    %12 = arith.xori %8, %11 : vector<32x1xi1>
    %13 = arith.andi %12, %6 : vector<32x1xi1>
    %14 = vector.broadcast %2 : i32 to vector<32x1xi32>
    %15 = arith.addi %4, %14 : vector<32x1xi32>
    %16 = arith.select %13, %15, %4 : vector<32x1xi1>, vector<32x1xi32>
    %c0_i32_3 = arith.constant 0 : i32
    %17 = vector.broadcast %c0_i32_3 : i32 to vector<32x1xi32>
    %18 = arith.cmpi ne, %16, %17 : vector<32x1xi32>
    %c15_i32 = arith.constant 15 : i32
    %19 = vector.broadcast %c15_i32 : i32 to vector<32x1xi32>
    %20 = arith.cmpi ne, %16, %19 : vector<32x1xi32>
    %21 = tpu.iota {dimensions = array<i32: 0>} : vector<16x1xi32>
    %c8_i32 = arith.constant 8 : i32
    %c0_i32_4 = arith.constant 0 : i32
    %22 = arith.cmpi eq, %c8_i32, %c0_i32_4 : i32
    %c1_i32_5 = arith.constant 1 : i32
    %23 = arith.select %22, %c1_i32_5, %c8_i32 : i32
    %24 = vector.broadcast %23 : i32 to vector<16x1xi32>
    %25 = arith.remsi %21, %24 : vector<16x1xi32>
    %c0_i32_6 = arith.constant 0 : i32
    %26 = vector.broadcast %c0_i32_6 : i32 to vector<16x1xi32>
    %27 = arith.cmpi ne, %25, %26 : vector<16x1xi32>
    %c0_i32_7 = arith.constant 0 : i32
    %28 = vector.broadcast %c0_i32_7 : i32 to vector<16x1xi32>
    %29 = arith.cmpi slt, %25, %28 : vector<16x1xi32>
    %c0_i32_8 = arith.constant 0 : i32
    %30 = arith.cmpi slt, %23, %c0_i32_8 : i32
    %31 = vector.broadcast %30 : i1 to vector<16x1xi1>
    %32 = vector.broadcast %31 : vector<16x1xi1> to vector<16x1xi1>
    %33 = arith.xori %29, %32 : vector<16x1xi1>
    %34 = arith.andi %33, %27 : vector<16x1xi1>
    %35 = vector.broadcast %23 : i32 to vector<16x1xi32>
    %36 = arith.addi %25, %35 : vector<16x1xi32>
    %37 = arith.select %34, %36, %25 : vector<16x1xi1>, vector<16x1xi32>
    %c0_i32_9 = arith.constant 0 : i32
    %38 = vector.broadcast %c0_i32_9 : i32 to vector<16x1xi32>
    %39 = arith.cmpi ne, %37, %38 : vector<16x1xi32>
    %c7_i32 = arith.constant 7 : i32
    %40 = vector.broadcast %c7_i32 : i32 to vector<16x1xi32>
    %41 = arith.cmpi ne, %37, %40 : vector<16x1xi32>
    %c0 = arith.constant 0 : index
    %c0_10 = arith.constant 0 : index
    %42 = vector.load %arg0[%c0, %c0_10] : memref<32x64xf32, #tpu.memory_space<vmem>>, vector<32x64xf32>
    %c1_i32_11 = arith.constant 1 : i32
    %43 = tpu.dynamic_rotate %42 by %c1_i32_11 dim 0 : vector<32x64xf32>, i32 -> vector<32x64xf32>
    %cst = arith.constant 0.000000e+00 : f32
    %44 = vector.shape_cast %18 : vector<32x1xi1> to vector<32x1xi1>
    %45 = vector.broadcast %44 : vector<32x1xi1> to vector<32x64xi1>
    %46 = vector.broadcast %cst : f32 to vector<32x64xf32>
    %47 = arith.select %45, %43, %46 : vector<32x64xi1>, vector<32x64xf32>
    %c31_i32 = arith.constant 31 : i32
    %48 = tpu.dynamic_rotate %42 by %c31_i32 dim 0 : vector<32x64xf32>, i32 -> vector<32x64xf32>
    %cst_12 = arith.constant 0.000000e+00 : f32
    %49 = vector.shape_cast %20 : vector<32x1xi1> to vector<32x1xi1>
    %50 = vector.broadcast %49 : vector<32x1xi1> to vector<32x64xi1>
    %51 = vector.broadcast %cst_12 : f32 to vector<32x64xf32>
    %52 = arith.select %50, %48, %51 : vector<32x64xi1>, vector<32x64xf32>
    %53 = tpu.concatenate %47, %42, %52 in 1 : vector<32x64xf32>, vector<32x64xf32>, vector<32x64xf32> -> vector<32x192xf32>
    %c0_13 = arith.constant 0 : index
    %c0_14 = arith.constant 0 : index
    %54 = vector.load %arg1[%c0_13, %c0_14] : memref<192x128xf32, #tpu.memory_space<vmem>>, vector<192x128xf32>
    %cst_15 = arith.constant dense<0.000000e+00> : vector<32x128xf32>
    %55 = tpu.matmul %53, %54, %cst_15 {dimension_numbers = #tpu.dot_dimension_numbers<[1], [0], [0], [1], [0, 0, 1, 1], [], []>} : vector<32x192xf32>, vector<192x128xf32>, vector<32x128xf32> -> vector<32x128xf32>
    %c0_16 = arith.constant 0 : index
    %c0_17 = arith.constant 0 : index
    %56 = vector.load %arg2[%c0_16, %c0_17] : memref<2x128xf32, #tpu.memory_space<vmem>>, vector<1x128xf32>
    %c1 = arith.constant 1 : index
    %c0_18 = arith.constant 0 : index
    %57 = vector.load %arg2[%c1, %c0_18] : memref<2x128xf32, #tpu.memory_space<vmem>>, vector<1x128xf32>
    %cst_19 = arith.constant dense<0.000000e+00> : vector<128xf32>
    %58 = vector.multi_reduction <add>, %55, %cst_19 [0] : vector<32x128xf32> to vector<128xf32>
    %59 = vector.shape_cast %58 : vector<128xf32> to vector<1x128xf32>
    %c8_i32_20 = arith.constant 8 : i32
    %60 = tpu.dynamic_rotate %59 by %c8_i32_20 dim 1 : vector<1x128xf32>, i32 -> vector<1x128xf32>
    %61 = arith.addf %59, %60 : vector<1x128xf32>
    %c16_i32_21 = arith.constant 16 : i32
    %62 = tpu.dynamic_rotate %61 by %c16_i32_21 dim 1 : vector<1x128xf32>, i32 -> vector<1x128xf32>
    %63 = arith.addf %61, %62 : vector<1x128xf32>
    %c32_i32 = arith.constant 32 : i32
    %64 = tpu.dynamic_rotate %63 by %c32_i32 dim 1 : vector<1x128xf32>, i32 -> vector<1x128xf32>
    %65 = arith.addf %63, %64 : vector<1x128xf32>
    %c64_i32 = arith.constant 64 : i32
    %66 = tpu.dynamic_rotate %65 by %c64_i32 dim 1 : vector<1x128xf32>, i32 -> vector<1x128xf32>
    %67 = arith.addf %65, %66 : vector<1x128xf32>
    %68 = arith.mulf %55, %55 : vector<32x128xf32>
    %cst_22 = arith.constant dense<0.000000e+00> : vector<128xf32>
    %69 = vector.multi_reduction <add>, %68, %cst_22 [0] : vector<32x128xf32> to vector<128xf32>
    %70 = vector.shape_cast %69 : vector<128xf32> to vector<1x128xf32>
    %c8_i32_23 = arith.constant 8 : i32
    %71 = tpu.dynamic_rotate %70 by %c8_i32_23 dim 1 : vector<1x128xf32>, i32 -> vector<1x128xf32>
    %72 = arith.addf %70, %71 : vector<1x128xf32>
    %c16_i32_24 = arith.constant 16 : i32
    %73 = tpu.dynamic_rotate %72 by %c16_i32_24 dim 1 : vector<1x128xf32>, i32 -> vector<1x128xf32>
    %74 = arith.addf %72, %73 : vector<1x128xf32>
    %c32_i32_25 = arith.constant 32 : i32
    %75 = tpu.dynamic_rotate %74 by %c32_i32_25 dim 1 : vector<1x128xf32>, i32 -> vector<1x128xf32>
    %76 = arith.addf %74, %75 : vector<1x128xf32>
    %c64_i32_26 = arith.constant 64 : i32
    %77 = tpu.dynamic_rotate %76 by %c64_i32_26 dim 1 : vector<1x128xf32>, i32 -> vector<1x128xf32>
    %78 = arith.addf %76, %77 : vector<1x128xf32>
    %cst_27 = arith.constant 0.001953125 : f32
    %79 = vector.broadcast %cst_27 : f32 to vector<1x128xf32>
    %80 = arith.mulf %67, %79 : vector<1x128xf32>
    %cst_28 = arith.constant 0.001953125 : f32
    %81 = vector.broadcast %cst_28 : f32 to vector<1x128xf32>
    %82 = arith.mulf %78, %81 : vector<1x128xf32>
    %83 = arith.mulf %80, %80 : vector<1x128xf32>
    %84 = arith.subf %82, %83 : vector<1x128xf32>
    %cst_29 = arith.constant 9.99999974E-6 : f32
    %85 = vector.broadcast %cst_29 : f32 to vector<1x128xf32>
    %86 = arith.addf %84, %85 : vector<1x128xf32>
    %87 = math.rsqrt %86 : vector<1x128xf32>
    %88 = arith.mulf %87, %56 : vector<1x128xf32>
    %89 = arith.mulf %80, %88 : vector<1x128xf32>
    %90 = arith.subf %57, %89 : vector<1x128xf32>
    %91 = vector.broadcast %88 : vector<1x128xf32> to vector<32x128xf32>
    %92 = arith.mulf %55, %91 : vector<32x128xf32>
    %93 = vector.broadcast %90 : vector<1x128xf32> to vector<32x128xf32>
    %94 = arith.addf %92, %93 : vector<32x128xf32>
    %c1_i32_30 = arith.constant 1 : i32
    %95 = tpu.dynamic_rotate %94 by %c1_i32_30 dim 0 : vector<32x128xf32>, i32 -> vector<32x128xf32>
    %cst_31 = arith.constant -3.000000e+38 : f32
    %96 = vector.shape_cast %18 : vector<32x1xi1> to vector<32x1xi1>
    %97 = vector.broadcast %96 : vector<32x1xi1> to vector<32x128xi1>
    %98 = vector.broadcast %cst_31 : f32 to vector<32x128xf32>
    %99 = arith.select %97, %95, %98 : vector<32x128xi1>, vector<32x128xf32>
    %c31_i32_32 = arith.constant 31 : i32
    %100 = tpu.dynamic_rotate %94 by %c31_i32_32 dim 0 : vector<32x128xf32>, i32 -> vector<32x128xf32>
    %cst_33 = arith.constant -3.000000e+38 : f32
    %101 = vector.shape_cast %20 : vector<32x1xi1> to vector<32x1xi1>
    %102 = vector.broadcast %101 : vector<32x1xi1> to vector<32x128xi1>
    %103 = vector.broadcast %cst_33 : f32 to vector<32x128xf32>
    %104 = arith.select %102, %100, %103 : vector<32x128xi1>, vector<32x128xf32>
    %105 = arith.maximumf %99, %94 : vector<32x128xf32>
    %106 = arith.maximumf %105, %104 : vector<32x128xf32>
    %107 = tpu.iota {dimensions = array<i32: 1>} : vector<1x128xi32>
    %c8_i32_34 = arith.constant 8 : i32
    %108 = vector.broadcast %c8_i32_34 : i32 to vector<1x128xi32>
    %109 = arith.cmpi sge, %107, %108 : vector<1x128xi32>
    %c8_i32_35 = arith.constant 8 : i32
    %110 = tpu.dynamic_rotate %106 by %c8_i32_35 dim 1 : vector<32x128xf32>, i32 -> vector<32x128xf32>
    %cst_36 = arith.constant -3.000000e+38 : f32
    %111 = vector.shape_cast %109 : vector<1x128xi1> to vector<1x128xi1>
    %112 = vector.broadcast %111 : vector<1x128xi1> to vector<32x128xi1>
    %113 = vector.broadcast %cst_36 : f32 to vector<32x128xf32>
    %114 = arith.select %112, %110, %113 : vector<32x128xi1>, vector<32x128xf32>
    %c120_i32 = arith.constant 120 : i32
    %115 = vector.broadcast %c120_i32 : i32 to vector<1x128xi32>
    %116 = arith.cmpi slt, %107, %115 : vector<1x128xi32>
    %c120_i32_37 = arith.constant 120 : i32
    %117 = tpu.dynamic_rotate %106 by %c120_i32_37 dim 1 : vector<32x128xf32>, i32 -> vector<32x128xf32>
    %cst_38 = arith.constant -3.000000e+38 : f32
    %118 = vector.shape_cast %116 : vector<1x128xi1> to vector<1x128xi1>
    %119 = vector.broadcast %118 : vector<1x128xi1> to vector<32x128xi1>
    %120 = vector.broadcast %cst_38 : f32 to vector<32x128xf32>
    %121 = arith.select %119, %117, %120 : vector<32x128xi1>, vector<32x128xf32>
    %122 = arith.maximumf %114, %106 : vector<32x128xf32>
    %123 = arith.maximumf %122, %121 : vector<32x128xf32>
    %c0_39 = arith.constant 0 : index
    %c0_40 = arith.constant 0 : index
    %124 = vector.load %arg3[%c0_39, %c0_40] : memref<16x32xf32, #tpu.memory_space<vmem>>, vector<16x32xf32>
    %cst_41 = arith.constant dense<0.000000e+00> : vector<16x128xf32>
    %125 = tpu.matmul %124, %123, %cst_41 {dimension_numbers = #tpu.dot_dimension_numbers<[1], [0], [0], [1], [0, 0, 1, 1], [], []>} : vector<16x32xf32>, vector<32x128xf32>, vector<16x128xf32> -> vector<16x128xf32>
    %c0_42 = arith.constant 0 : index
    %c0_43 = arith.constant 0 : index
    %126 = vector.load %arg4[%c0_42, %c0_43] : memref<128x64xf32, #tpu.memory_space<vmem>>, vector<128x64xf32>
    %cst_44 = arith.constant dense<0.000000e+00> : vector<16x64xf32>
    %127 = tpu.matmul %125, %126, %cst_44 {dimension_numbers = #tpu.dot_dimension_numbers<[1], [0], [0], [1], [0, 0, 1, 1], [], []>} : vector<16x128xf32>, vector<128x64xf32>, vector<16x64xf32> -> vector<16x64xf32>
    %cst_45 = arith.constant 0.000000e+00 : f32
    %128 = vector.broadcast %cst_45 : f32 to vector<16x64xf32>
    %129 = arith.cmpf ogt, %127, %128 : vector<16x64xf32>
    %130 = math.exp %127 : vector<16x64xf32>
    %cst_46 = arith.constant 1.000000e+00 : f32
    %131 = vector.broadcast %cst_46 : f32 to vector<16x64xf32>
    %132 = arith.subf %130, %131 : vector<16x64xf32>
    %133 = arith.select %129, %127, %132 : vector<16x64xi1>, vector<16x64xf32>
    %c1_i32_47 = arith.constant 1 : i32
    %134 = tpu.dynamic_rotate %133 by %c1_i32_47 dim 0 : vector<16x64xf32>, i32 -> vector<16x64xf32>
    %cst_48 = arith.constant 0.000000e+00 : f32
    %135 = vector.shape_cast %39 : vector<16x1xi1> to vector<16x1xi1>
    %136 = vector.broadcast %135 : vector<16x1xi1> to vector<16x64xi1>
    %137 = vector.broadcast %cst_48 : f32 to vector<16x64xf32>
    %138 = arith.select %136, %134, %137 : vector<16x64xi1>, vector<16x64xf32>
    %c15_i32_49 = arith.constant 15 : i32
    %139 = tpu.dynamic_rotate %133 by %c15_i32_49 dim 0 : vector<16x64xf32>, i32 -> vector<16x64xf32>
    %cst_50 = arith.constant 0.000000e+00 : f32
    %140 = vector.shape_cast %41 : vector<16x1xi1> to vector<16x1xi1>
    %141 = vector.broadcast %140 : vector<16x1xi1> to vector<16x64xi1>
    %142 = vector.broadcast %cst_50 : f32 to vector<16x64xf32>
    %143 = arith.select %141, %139, %142 : vector<16x64xi1>, vector<16x64xf32>
    %144 = tpu.concatenate %138, %133, %143 in 1 : vector<16x64xf32>, vector<16x64xf32>, vector<16x64xf32> -> vector<16x192xf32>
    %c0_51 = arith.constant 0 : index
    %c0_52 = arith.constant 0 : index
    %145 = vector.load %arg5[%c0_51, %c0_52] : memref<192x64xf32, #tpu.memory_space<vmem>>, vector<192x64xf32>
    %cst_53 = arith.constant dense<0.000000e+00> : vector<16x64xf32>
    %146 = tpu.matmul %144, %145, %cst_53 {dimension_numbers = #tpu.dot_dimension_numbers<[1], [0], [0], [1], [0, 0, 1, 1], [], []>} : vector<16x192xf32>, vector<192x64xf32>, vector<16x64xf32> -> vector<16x64xf32>
    %c0_54 = arith.constant 0 : index
    %c0_55 = arith.constant 0 : index
    %147 = vector.load %arg6[%c0_54, %c0_55] : memref<2x64xf32, #tpu.memory_space<vmem>>, vector<1x64xf32>
    %c1_56 = arith.constant 1 : index
    %c0_57 = arith.constant 0 : index
    %148 = vector.load %arg6[%c1_56, %c0_57] : memref<2x64xf32, #tpu.memory_space<vmem>>, vector<1x64xf32>
    %cst_58 = arith.constant dense<0.000000e+00> : vector<64xf32>
    %149 = vector.multi_reduction <add>, %146, %cst_58 [0] : vector<16x64xf32> to vector<64xf32>
    %150 = vector.shape_cast %149 : vector<64xf32> to vector<1x64xf32>
    %cst_59 = arith.constant 0.000000e+00 : f32
    %151 = vector.broadcast %cst_59 : f32 to vector<1x64xf32>
    %152 = tpu.concatenate %150, %151 in 1 : vector<1x64xf32>, vector<1x64xf32> -> vector<1x128xf32>
    %c8_i32_60 = arith.constant 8 : i32
    %153 = tpu.dynamic_rotate %152 by %c8_i32_60 dim 1 : vector<1x128xf32>, i32 -> vector<1x128xf32>
    %154 = arith.addf %152, %153 : vector<1x128xf32>
    %c16_i32_61 = arith.constant 16 : i32
    %155 = tpu.dynamic_rotate %154 by %c16_i32_61 dim 1 : vector<1x128xf32>, i32 -> vector<1x128xf32>
    %156 = arith.addf %154, %155 : vector<1x128xf32>
    %c32_i32_62 = arith.constant 32 : i32
    %157 = tpu.dynamic_rotate %156 by %c32_i32_62 dim 1 : vector<1x128xf32>, i32 -> vector<1x128xf32>
    %158 = arith.addf %156, %157 : vector<1x128xf32>
    %c64_i32_63 = arith.constant 64 : i32
    %159 = tpu.dynamic_rotate %158 by %c64_i32_63 dim 1 : vector<1x128xf32>, i32 -> vector<1x128xf32>
    %160 = arith.addf %158, %159 : vector<1x128xf32>
    %161 = vector.extract_strided_slice %160 {offsets = [0, 0], sizes = [1, 64], strides = [1, 1]} : vector<1x128xf32> to vector<1x64xf32>
    %162 = arith.mulf %146, %146 : vector<16x64xf32>
    %cst_64 = arith.constant dense<0.000000e+00> : vector<64xf32>
    %163 = vector.multi_reduction <add>, %162, %cst_64 [0] : vector<16x64xf32> to vector<64xf32>
    %164 = vector.shape_cast %163 : vector<64xf32> to vector<1x64xf32>
    %cst_65 = arith.constant 0.000000e+00 : f32
    %165 = vector.broadcast %cst_65 : f32 to vector<1x64xf32>
    %166 = tpu.concatenate %164, %165 in 1 : vector<1x64xf32>, vector<1x64xf32> -> vector<1x128xf32>
    %c8_i32_66 = arith.constant 8 : i32
    %167 = tpu.dynamic_rotate %166 by %c8_i32_66 dim 1 : vector<1x128xf32>, i32 -> vector<1x128xf32>
    %168 = arith.addf %166, %167 : vector<1x128xf32>
    %c16_i32_67 = arith.constant 16 : i32
    %169 = tpu.dynamic_rotate %168 by %c16_i32_67 dim 1 : vector<1x128xf32>, i32 -> vector<1x128xf32>
    %170 = arith.addf %168, %169 : vector<1x128xf32>
    %c32_i32_68 = arith.constant 32 : i32
    %171 = tpu.dynamic_rotate %170 by %c32_i32_68 dim 1 : vector<1x128xf32>, i32 -> vector<1x128xf32>
    %172 = arith.addf %170, %171 : vector<1x128xf32>
    %c64_i32_69 = arith.constant 64 : i32
    %173 = tpu.dynamic_rotate %172 by %c64_i32_69 dim 1 : vector<1x128xf32>, i32 -> vector<1x128xf32>
    %174 = arith.addf %172, %173 : vector<1x128xf32>
    %175 = vector.extract_strided_slice %174 {offsets = [0, 0], sizes = [1, 64], strides = [1, 1]} : vector<1x128xf32> to vector<1x64xf32>
    %cst_70 = arith.constant 7.812500e-03 : f32
    %176 = vector.broadcast %cst_70 : f32 to vector<1x64xf32>
    %177 = arith.mulf %161, %176 : vector<1x64xf32>
    %cst_71 = arith.constant 7.812500e-03 : f32
    %178 = vector.broadcast %cst_71 : f32 to vector<1x64xf32>
    %179 = arith.mulf %175, %178 : vector<1x64xf32>
    %180 = arith.mulf %177, %177 : vector<1x64xf32>
    %181 = arith.subf %179, %180 : vector<1x64xf32>
    %cst_72 = arith.constant 9.99999974E-6 : f32
    %182 = vector.broadcast %cst_72 : f32 to vector<1x64xf32>
    %183 = arith.addf %181, %182 : vector<1x64xf32>
    %184 = math.rsqrt %183 : vector<1x64xf32>
    %185 = arith.mulf %184, %147 : vector<1x64xf32>
    %186 = arith.mulf %177, %185 : vector<1x64xf32>
    %187 = arith.subf %148, %186 : vector<1x64xf32>
    %188 = vector.broadcast %185 : vector<1x64xf32> to vector<16x64xf32>
    %189 = arith.mulf %146, %188 : vector<16x64xf32>
    %190 = vector.broadcast %187 : vector<1x64xf32> to vector<16x64xf32>
    %191 = arith.addf %189, %190 : vector<16x64xf32>
    %cst_73 = arith.constant 0.000000e+00 : f32
    %192 = vector.broadcast %cst_73 : f32 to vector<16x64xf32>
    %193 = arith.cmpf ogt, %191, %192 : vector<16x64xf32>
    %194 = math.exp %191 : vector<16x64xf32>
    %cst_74 = arith.constant 1.000000e+00 : f32
    %195 = vector.broadcast %cst_74 : f32 to vector<16x64xf32>
    %196 = arith.subf %194, %195 : vector<16x64xf32>
    %197 = arith.select %193, %191, %196 : vector<16x64xi1>, vector<16x64xf32>
    %c1_i32_75 = arith.constant 1 : i32
    %198 = tpu.dynamic_rotate %197 by %c1_i32_75 dim 0 : vector<16x64xf32>, i32 -> vector<16x64xf32>
    %cst_76 = arith.constant 0.000000e+00 : f32
    %199 = vector.shape_cast %39 : vector<16x1xi1> to vector<16x1xi1>
    %200 = vector.broadcast %199 : vector<16x1xi1> to vector<16x64xi1>
    %201 = vector.broadcast %cst_76 : f32 to vector<16x64xf32>
    %202 = arith.select %200, %198, %201 : vector<16x64xi1>, vector<16x64xf32>
    %c15_i32_77 = arith.constant 15 : i32
    %203 = tpu.dynamic_rotate %197 by %c15_i32_77 dim 0 : vector<16x64xf32>, i32 -> vector<16x64xf32>
    %cst_78 = arith.constant 0.000000e+00 : f32
    %204 = vector.shape_cast %41 : vector<16x1xi1> to vector<16x1xi1>
    %205 = vector.broadcast %204 : vector<16x1xi1> to vector<16x64xi1>
    %206 = vector.broadcast %cst_78 : f32 to vector<16x64xf32>
    %207 = arith.select %205, %203, %206 : vector<16x64xi1>, vector<16x64xf32>
    %208 = tpu.concatenate %202, %197, %207 in 1 : vector<16x64xf32>, vector<16x64xf32>, vector<16x64xf32> -> vector<16x192xf32>
    %c0_79 = arith.constant 0 : index
    %c0_80 = arith.constant 0 : index
    %209 = vector.load %arg7[%c0_79, %c0_80] : memref<192x64xf32, #tpu.memory_space<vmem>>, vector<192x64xf32>
    %cst_81 = arith.constant dense<0.000000e+00> : vector<16x64xf32>
    %210 = tpu.matmul %208, %209, %cst_81 {dimension_numbers = #tpu.dot_dimension_numbers<[1], [0], [0], [1], [0, 0, 1, 1], [], []>} : vector<16x192xf32>, vector<192x64xf32>, vector<16x64xf32> -> vector<16x64xf32>
    %c0_82 = arith.constant 0 : index
    %c0_83 = arith.constant 0 : index
    %211 = vector.load %arg8[%c0_82, %c0_83] : memref<2x64xf32, #tpu.memory_space<vmem>>, vector<1x64xf32>
    %c1_84 = arith.constant 1 : index
    %c0_85 = arith.constant 0 : index
    %212 = vector.load %arg8[%c1_84, %c0_85] : memref<2x64xf32, #tpu.memory_space<vmem>>, vector<1x64xf32>
    %cst_86 = arith.constant dense<0.000000e+00> : vector<64xf32>
    %213 = vector.multi_reduction <add>, %210, %cst_86 [0] : vector<16x64xf32> to vector<64xf32>
    %214 = vector.shape_cast %213 : vector<64xf32> to vector<1x64xf32>
    %cst_87 = arith.constant 0.000000e+00 : f32
    %215 = vector.broadcast %cst_87 : f32 to vector<1x64xf32>
    %216 = tpu.concatenate %214, %215 in 1 : vector<1x64xf32>, vector<1x64xf32> -> vector<1x128xf32>
    %c8_i32_88 = arith.constant 8 : i32
    %217 = tpu.dynamic_rotate %216 by %c8_i32_88 dim 1 : vector<1x128xf32>, i32 -> vector<1x128xf32>
    %218 = arith.addf %216, %217 : vector<1x128xf32>
    %c16_i32_89 = arith.constant 16 : i32
    %219 = tpu.dynamic_rotate %218 by %c16_i32_89 dim 1 : vector<1x128xf32>, i32 -> vector<1x128xf32>
    %220 = arith.addf %218, %219 : vector<1x128xf32>
    %c32_i32_90 = arith.constant 32 : i32
    %221 = tpu.dynamic_rotate %220 by %c32_i32_90 dim 1 : vector<1x128xf32>, i32 -> vector<1x128xf32>
    %222 = arith.addf %220, %221 : vector<1x128xf32>
    %c64_i32_91 = arith.constant 64 : i32
    %223 = tpu.dynamic_rotate %222 by %c64_i32_91 dim 1 : vector<1x128xf32>, i32 -> vector<1x128xf32>
    %224 = arith.addf %222, %223 : vector<1x128xf32>
    %225 = vector.extract_strided_slice %224 {offsets = [0, 0], sizes = [1, 64], strides = [1, 1]} : vector<1x128xf32> to vector<1x64xf32>
    %226 = arith.mulf %210, %210 : vector<16x64xf32>
    %cst_92 = arith.constant dense<0.000000e+00> : vector<64xf32>
    %227 = vector.multi_reduction <add>, %226, %cst_92 [0] : vector<16x64xf32> to vector<64xf32>
    %228 = vector.shape_cast %227 : vector<64xf32> to vector<1x64xf32>
    %cst_93 = arith.constant 0.000000e+00 : f32
    %229 = vector.broadcast %cst_93 : f32 to vector<1x64xf32>
    %230 = tpu.concatenate %228, %229 in 1 : vector<1x64xf32>, vector<1x64xf32> -> vector<1x128xf32>
    %c8_i32_94 = arith.constant 8 : i32
    %231 = tpu.dynamic_rotate %230 by %c8_i32_94 dim 1 : vector<1x128xf32>, i32 -> vector<1x128xf32>
    %232 = arith.addf %230, %231 : vector<1x128xf32>
    %c16_i32_95 = arith.constant 16 : i32
    %233 = tpu.dynamic_rotate %232 by %c16_i32_95 dim 1 : vector<1x128xf32>, i32 -> vector<1x128xf32>
    %234 = arith.addf %232, %233 : vector<1x128xf32>
    %c32_i32_96 = arith.constant 32 : i32
    %235 = tpu.dynamic_rotate %234 by %c32_i32_96 dim 1 : vector<1x128xf32>, i32 -> vector<1x128xf32>
    %236 = arith.addf %234, %235 : vector<1x128xf32>
    %c64_i32_97 = arith.constant 64 : i32
    %237 = tpu.dynamic_rotate %236 by %c64_i32_97 dim 1 : vector<1x128xf32>, i32 -> vector<1x128xf32>
    %238 = arith.addf %236, %237 : vector<1x128xf32>
    %239 = vector.extract_strided_slice %238 {offsets = [0, 0], sizes = [1, 64], strides = [1, 1]} : vector<1x128xf32> to vector<1x64xf32>
    %cst_98 = arith.constant 7.812500e-03 : f32
    %240 = vector.broadcast %cst_98 : f32 to vector<1x64xf32>
    %241 = arith.mulf %225, %240 : vector<1x64xf32>
    %cst_99 = arith.constant 7.812500e-03 : f32
    %242 = vector.broadcast %cst_99 : f32 to vector<1x64xf32>
    %243 = arith.mulf %239, %242 : vector<1x64xf32>
    %244 = arith.mulf %241, %241 : vector<1x64xf32>
    %245 = arith.subf %243, %244 : vector<1x64xf32>
    %cst_100 = arith.constant 9.99999974E-6 : f32
    %246 = vector.broadcast %cst_100 : f32 to vector<1x64xf32>
    %247 = arith.addf %245, %246 : vector<1x64xf32>
    %248 = math.rsqrt %247 : vector<1x64xf32>
    %249 = arith.mulf %248, %211 : vector<1x64xf32>
    %250 = arith.mulf %241, %249 : vector<1x64xf32>
    %251 = arith.subf %212, %250 : vector<1x64xf32>
    %252 = vector.broadcast %249 : vector<1x64xf32> to vector<16x64xf32>
    %253 = arith.mulf %210, %252 : vector<16x64xf32>
    %254 = vector.broadcast %251 : vector<1x64xf32> to vector<16x64xf32>
    %255 = arith.addf %253, %254 : vector<16x64xf32>
    %256 = arith.addf %255, %127 : vector<16x64xf32>
    %cst_101 = arith.constant 0.000000e+00 : f32
    %257 = vector.broadcast %cst_101 : f32 to vector<16x64xf32>
    %258 = arith.cmpf ogt, %256, %257 : vector<16x64xf32>
    %259 = math.exp %256 : vector<16x64xf32>
    %cst_102 = arith.constant 1.000000e+00 : f32
    %260 = vector.broadcast %cst_102 : f32 to vector<16x64xf32>
    %261 = arith.subf %259, %260 : vector<16x64xf32>
    %262 = arith.select %258, %256, %261 : vector<16x64xi1>, vector<16x64xf32>
    %c1_i32_103 = arith.constant 1 : i32
    %263 = tpu.dynamic_rotate %262 by %c1_i32_103 dim 0 : vector<16x64xf32>, i32 -> vector<16x64xf32>
    %cst_104 = arith.constant 0.000000e+00 : f32
    %264 = vector.shape_cast %39 : vector<16x1xi1> to vector<16x1xi1>
    %265 = vector.broadcast %264 : vector<16x1xi1> to vector<16x64xi1>
    %266 = vector.broadcast %cst_104 : f32 to vector<16x64xf32>
    %267 = arith.select %265, %263, %266 : vector<16x64xi1>, vector<16x64xf32>
    %c15_i32_105 = arith.constant 15 : i32
    %268 = tpu.dynamic_rotate %262 by %c15_i32_105 dim 0 : vector<16x64xf32>, i32 -> vector<16x64xf32>
    %cst_106 = arith.constant 0.000000e+00 : f32
    %269 = vector.shape_cast %41 : vector<16x1xi1> to vector<16x1xi1>
    %270 = vector.broadcast %269 : vector<16x1xi1> to vector<16x64xi1>
    %271 = vector.broadcast %cst_106 : f32 to vector<16x64xf32>
    %272 = arith.select %270, %268, %271 : vector<16x64xi1>, vector<16x64xf32>
    %273 = tpu.concatenate %267, %262, %272 in 1 : vector<16x64xf32>, vector<16x64xf32>, vector<16x64xf32> -> vector<16x192xf32>
    %c0_107 = arith.constant 0 : index
    %c0_108 = arith.constant 0 : index
    %274 = vector.load %arg9[%c0_107, %c0_108] : memref<192x64xf32, #tpu.memory_space<vmem>>, vector<192x64xf32>
    %cst_109 = arith.constant dense<0.000000e+00> : vector<16x64xf32>
    %275 = tpu.matmul %273, %274, %cst_109 {dimension_numbers = #tpu.dot_dimension_numbers<[1], [0], [0], [1], [0, 0, 1, 1], [], []>} : vector<16x192xf32>, vector<192x64xf32>, vector<16x64xf32> -> vector<16x64xf32>
    %c0_110 = arith.constant 0 : index
    %c0_111 = arith.constant 0 : index
    %276 = vector.load %arg10[%c0_110, %c0_111] : memref<2x64xf32, #tpu.memory_space<vmem>>, vector<1x64xf32>
    %c1_112 = arith.constant 1 : index
    %c0_113 = arith.constant 0 : index
    %277 = vector.load %arg10[%c1_112, %c0_113] : memref<2x64xf32, #tpu.memory_space<vmem>>, vector<1x64xf32>
    %cst_114 = arith.constant dense<0.000000e+00> : vector<64xf32>
    %278 = vector.multi_reduction <add>, %275, %cst_114 [0] : vector<16x64xf32> to vector<64xf32>
    %279 = vector.shape_cast %278 : vector<64xf32> to vector<1x64xf32>
    %cst_115 = arith.constant 0.000000e+00 : f32
    %280 = vector.broadcast %cst_115 : f32 to vector<1x64xf32>
    %281 = tpu.concatenate %279, %280 in 1 : vector<1x64xf32>, vector<1x64xf32> -> vector<1x128xf32>
    %c8_i32_116 = arith.constant 8 : i32
    %282 = tpu.dynamic_rotate %281 by %c8_i32_116 dim 1 : vector<1x128xf32>, i32 -> vector<1x128xf32>
    %283 = arith.addf %281, %282 : vector<1x128xf32>
    %c16_i32_117 = arith.constant 16 : i32
    %284 = tpu.dynamic_rotate %283 by %c16_i32_117 dim 1 : vector<1x128xf32>, i32 -> vector<1x128xf32>
    %285 = arith.addf %283, %284 : vector<1x128xf32>
    %c32_i32_118 = arith.constant 32 : i32
    %286 = tpu.dynamic_rotate %285 by %c32_i32_118 dim 1 : vector<1x128xf32>, i32 -> vector<1x128xf32>
    %287 = arith.addf %285, %286 : vector<1x128xf32>
    %c64_i32_119 = arith.constant 64 : i32
    %288 = tpu.dynamic_rotate %287 by %c64_i32_119 dim 1 : vector<1x128xf32>, i32 -> vector<1x128xf32>
    %289 = arith.addf %287, %288 : vector<1x128xf32>
    %290 = vector.extract_strided_slice %289 {offsets = [0, 0], sizes = [1, 64], strides = [1, 1]} : vector<1x128xf32> to vector<1x64xf32>
    %291 = arith.mulf %275, %275 : vector<16x64xf32>
    %cst_120 = arith.constant dense<0.000000e+00> : vector<64xf32>
    %292 = vector.multi_reduction <add>, %291, %cst_120 [0] : vector<16x64xf32> to vector<64xf32>
    %293 = vector.shape_cast %292 : vector<64xf32> to vector<1x64xf32>
    %cst_121 = arith.constant 0.000000e+00 : f32
    %294 = vector.broadcast %cst_121 : f32 to vector<1x64xf32>
    %295 = tpu.concatenate %293, %294 in 1 : vector<1x64xf32>, vector<1x64xf32> -> vector<1x128xf32>
    %c8_i32_122 = arith.constant 8 : i32
    %296 = tpu.dynamic_rotate %295 by %c8_i32_122 dim 1 : vector<1x128xf32>, i32 -> vector<1x128xf32>
    %297 = arith.addf %295, %296 : vector<1x128xf32>
    %c16_i32_123 = arith.constant 16 : i32
    %298 = tpu.dynamic_rotate %297 by %c16_i32_123 dim 1 : vector<1x128xf32>, i32 -> vector<1x128xf32>
    %299 = arith.addf %297, %298 : vector<1x128xf32>
    %c32_i32_124 = arith.constant 32 : i32
    %300 = tpu.dynamic_rotate %299 by %c32_i32_124 dim 1 : vector<1x128xf32>, i32 -> vector<1x128xf32>
    %301 = arith.addf %299, %300 : vector<1x128xf32>
    %c64_i32_125 = arith.constant 64 : i32
    %302 = tpu.dynamic_rotate %301 by %c64_i32_125 dim 1 : vector<1x128xf32>, i32 -> vector<1x128xf32>
    %303 = arith.addf %301, %302 : vector<1x128xf32>
    %304 = vector.extract_strided_slice %303 {offsets = [0, 0], sizes = [1, 64], strides = [1, 1]} : vector<1x128xf32> to vector<1x64xf32>
    %cst_126 = arith.constant 7.812500e-03 : f32
    %305 = vector.broadcast %cst_126 : f32 to vector<1x64xf32>
    %306 = arith.mulf %290, %305 : vector<1x64xf32>
    %cst_127 = arith.constant 7.812500e-03 : f32
    %307 = vector.broadcast %cst_127 : f32 to vector<1x64xf32>
    %308 = arith.mulf %304, %307 : vector<1x64xf32>
    %309 = arith.mulf %306, %306 : vector<1x64xf32>
    %310 = arith.subf %308, %309 : vector<1x64xf32>
    %cst_128 = arith.constant 9.99999974E-6 : f32
    %311 = vector.broadcast %cst_128 : f32 to vector<1x64xf32>
    %312 = arith.addf %310, %311 : vector<1x64xf32>
    %313 = math.rsqrt %312 : vector<1x64xf32>
    %314 = arith.mulf %313, %276 : vector<1x64xf32>
    %315 = arith.mulf %306, %314 : vector<1x64xf32>
    %316 = arith.subf %277, %315 : vector<1x64xf32>
    %317 = vector.broadcast %314 : vector<1x64xf32> to vector<16x64xf32>
    %318 = arith.mulf %275, %317 : vector<16x64xf32>
    %319 = vector.broadcast %316 : vector<1x64xf32> to vector<16x64xf32>
    %320 = arith.addf %318, %319 : vector<16x64xf32>
    %cst_129 = arith.constant 0.000000e+00 : f32
    %321 = vector.broadcast %cst_129 : f32 to vector<16x64xf32>
    %322 = arith.cmpf ogt, %320, %321 : vector<16x64xf32>
    %323 = math.exp %320 : vector<16x64xf32>
    %cst_130 = arith.constant 1.000000e+00 : f32
    %324 = vector.broadcast %cst_130 : f32 to vector<16x64xf32>
    %325 = arith.subf %323, %324 : vector<16x64xf32>
    %326 = arith.select %322, %320, %325 : vector<16x64xi1>, vector<16x64xf32>
    %c1_i32_131 = arith.constant 1 : i32
    %327 = tpu.dynamic_rotate %326 by %c1_i32_131 dim 0 : vector<16x64xf32>, i32 -> vector<16x64xf32>
    %cst_132 = arith.constant 0.000000e+00 : f32
    %328 = vector.shape_cast %39 : vector<16x1xi1> to vector<16x1xi1>
    %329 = vector.broadcast %328 : vector<16x1xi1> to vector<16x64xi1>
    %330 = vector.broadcast %cst_132 : f32 to vector<16x64xf32>
    %331 = arith.select %329, %327, %330 : vector<16x64xi1>, vector<16x64xf32>
    %c15_i32_133 = arith.constant 15 : i32
    %332 = tpu.dynamic_rotate %326 by %c15_i32_133 dim 0 : vector<16x64xf32>, i32 -> vector<16x64xf32>
    %cst_134 = arith.constant 0.000000e+00 : f32
    %333 = vector.shape_cast %41 : vector<16x1xi1> to vector<16x1xi1>
    %334 = vector.broadcast %333 : vector<16x1xi1> to vector<16x64xi1>
    %335 = vector.broadcast %cst_134 : f32 to vector<16x64xf32>
    %336 = arith.select %334, %332, %335 : vector<16x64xi1>, vector<16x64xf32>
    %337 = tpu.concatenate %331, %326, %336 in 1 : vector<16x64xf32>, vector<16x64xf32>, vector<16x64xf32> -> vector<16x192xf32>
    %c0_135 = arith.constant 0 : index
    %c0_136 = arith.constant 0 : index
    %338 = vector.load %arg11[%c0_135, %c0_136] : memref<192x64xf32, #tpu.memory_space<vmem>>, vector<192x64xf32>
    %cst_137 = arith.constant dense<0.000000e+00> : vector<16x64xf32>
    %339 = tpu.matmul %337, %338, %cst_137 {dimension_numbers = #tpu.dot_dimension_numbers<[1], [0], [0], [1], [0, 0, 1, 1], [], []>} : vector<16x192xf32>, vector<192x64xf32>, vector<16x64xf32> -> vector<16x64xf32>
    %c0_138 = arith.constant 0 : index
    %c0_139 = arith.constant 0 : index
    %340 = vector.load %arg12[%c0_138, %c0_139] : memref<2x64xf32, #tpu.memory_space<vmem>>, vector<1x64xf32>
    %c1_140 = arith.constant 1 : index
    %c0_141 = arith.constant 0 : index
    %341 = vector.load %arg12[%c1_140, %c0_141] : memref<2x64xf32, #tpu.memory_space<vmem>>, vector<1x64xf32>
    %cst_142 = arith.constant dense<0.000000e+00> : vector<64xf32>
    %342 = vector.multi_reduction <add>, %339, %cst_142 [0] : vector<16x64xf32> to vector<64xf32>
    %343 = vector.shape_cast %342 : vector<64xf32> to vector<1x64xf32>
    %cst_143 = arith.constant 0.000000e+00 : f32
    %344 = vector.broadcast %cst_143 : f32 to vector<1x64xf32>
    %345 = tpu.concatenate %343, %344 in 1 : vector<1x64xf32>, vector<1x64xf32> -> vector<1x128xf32>
    %c8_i32_144 = arith.constant 8 : i32
    %346 = tpu.dynamic_rotate %345 by %c8_i32_144 dim 1 : vector<1x128xf32>, i32 -> vector<1x128xf32>
    %347 = arith.addf %345, %346 : vector<1x128xf32>
    %c16_i32_145 = arith.constant 16 : i32
    %348 = tpu.dynamic_rotate %347 by %c16_i32_145 dim 1 : vector<1x128xf32>, i32 -> vector<1x128xf32>
    %349 = arith.addf %347, %348 : vector<1x128xf32>
    %c32_i32_146 = arith.constant 32 : i32
    %350 = tpu.dynamic_rotate %349 by %c32_i32_146 dim 1 : vector<1x128xf32>, i32 -> vector<1x128xf32>
    %351 = arith.addf %349, %350 : vector<1x128xf32>
    %c64_i32_147 = arith.constant 64 : i32
    %352 = tpu.dynamic_rotate %351 by %c64_i32_147 dim 1 : vector<1x128xf32>, i32 -> vector<1x128xf32>
    %353 = arith.addf %351, %352 : vector<1x128xf32>
    %354 = vector.extract_strided_slice %353 {offsets = [0, 0], sizes = [1, 64], strides = [1, 1]} : vector<1x128xf32> to vector<1x64xf32>
    %355 = arith.mulf %339, %339 : vector<16x64xf32>
    %cst_148 = arith.constant dense<0.000000e+00> : vector<64xf32>
    %356 = vector.multi_reduction <add>, %355, %cst_148 [0] : vector<16x64xf32> to vector<64xf32>
    %357 = vector.shape_cast %356 : vector<64xf32> to vector<1x64xf32>
    %cst_149 = arith.constant 0.000000e+00 : f32
    %358 = vector.broadcast %cst_149 : f32 to vector<1x64xf32>
    %359 = tpu.concatenate %357, %358 in 1 : vector<1x64xf32>, vector<1x64xf32> -> vector<1x128xf32>
    %c8_i32_150 = arith.constant 8 : i32
    %360 = tpu.dynamic_rotate %359 by %c8_i32_150 dim 1 : vector<1x128xf32>, i32 -> vector<1x128xf32>
    %361 = arith.addf %359, %360 : vector<1x128xf32>
    %c16_i32_151 = arith.constant 16 : i32
    %362 = tpu.dynamic_rotate %361 by %c16_i32_151 dim 1 : vector<1x128xf32>, i32 -> vector<1x128xf32>
    %363 = arith.addf %361, %362 : vector<1x128xf32>
    %c32_i32_152 = arith.constant 32 : i32
    %364 = tpu.dynamic_rotate %363 by %c32_i32_152 dim 1 : vector<1x128xf32>, i32 -> vector<1x128xf32>
    %365 = arith.addf %363, %364 : vector<1x128xf32>
    %c64_i32_153 = arith.constant 64 : i32
    %366 = tpu.dynamic_rotate %365 by %c64_i32_153 dim 1 : vector<1x128xf32>, i32 -> vector<1x128xf32>
    %367 = arith.addf %365, %366 : vector<1x128xf32>
    %368 = vector.extract_strided_slice %367 {offsets = [0, 0], sizes = [1, 64], strides = [1, 1]} : vector<1x128xf32> to vector<1x64xf32>
    %cst_154 = arith.constant 7.812500e-03 : f32
    %369 = vector.broadcast %cst_154 : f32 to vector<1x64xf32>
    %370 = arith.mulf %354, %369 : vector<1x64xf32>
    %cst_155 = arith.constant 7.812500e-03 : f32
    %371 = vector.broadcast %cst_155 : f32 to vector<1x64xf32>
    %372 = arith.mulf %368, %371 : vector<1x64xf32>
    %373 = arith.mulf %370, %370 : vector<1x64xf32>
    %374 = arith.subf %372, %373 : vector<1x64xf32>
    %cst_156 = arith.constant 9.99999974E-6 : f32
    %375 = vector.broadcast %cst_156 : f32 to vector<1x64xf32>
    %376 = arith.addf %374, %375 : vector<1x64xf32>
    %377 = math.rsqrt %376 : vector<1x64xf32>
    %378 = arith.mulf %377, %340 : vector<1x64xf32>
    %379 = arith.mulf %370, %378 : vector<1x64xf32>
    %380 = arith.subf %341, %379 : vector<1x64xf32>
    %381 = vector.broadcast %378 : vector<1x64xf32> to vector<16x64xf32>
    %382 = arith.mulf %339, %381 : vector<16x64xf32>
    %383 = vector.broadcast %380 : vector<1x64xf32> to vector<16x64xf32>
    %384 = arith.addf %382, %383 : vector<16x64xf32>
    %385 = arith.addf %384, %256 : vector<16x64xf32>
    %c0_157 = arith.constant 0 : index
    %c0_158 = arith.constant 0 : index
    %386 = vector.load %arg13[%c0_157, %c0_158] : memref<16x64xf32, #tpu.memory_space<vmem>>, vector<16x64xf32>
    tpu.vector_store %arg13[%c0_157, %c0_158], %385 {strides = array<i32>} : memref<16x64xf32, #tpu.memory_space<vmem>>, vector<16x64xf32>,
    return
  }
}

</mosaic_0001>

<llo_original>
// kernel: tile.53
$region0: #{tile.53}
  #allocation0 [shape = 's32[1]{0}', space=sflag, size = 0x4, scoped, tag = 'scoped memory for tile.53']
  %s0 = inlined_call_operand.vmem [shape: f32[8], index: 0, kind: input, shape index: {}]
  %s1 = inlined_call_operand.vmem [shape: f32[16,8], index: 1, kind: output, shape index: {}]
  // Predicated region
  $region2: #{tile.53} parent=0 // pred_check
    _
  $region3: #{tile.53} parent=0 // pred_check_branch
    %3 = sbr.rel (0) target = $region5
  $region4: #{tile.53} parent=0 // pred_region
    _
  $region5: #{tile.53} parent=0 // pred_fallthru
    _
  %v4 = vld [vmem:[%s0] ss:$0 sm:$0xff]
  %5 = vst [vmem:[%s1] sm:$0xff] %v4
  %s6 = scalar_lea.vmem %s1, 8
  %7 = vst [vmem:[%s6] sm:$0xff] %v4

// kernel: tile.58
$region0: #{tile.58}
  %s0 = inlined_call_operand.vmem [shape: f32[16,8], index: 0, kind: input, shape index: {}]
  %s1 = inlined_call_operand.vmem [shape: f32[1,128], index: 1, kind: output, shape index: {}]
  $region1: #{tile.58} parent=0
    #allocation0 [shape = 'u8[4096]{0}', space=vmem, size = 0x1000, scoped, tag = 'scoped mem for output reshape']
    %v2 = vld [vmem:[%s0] sm:$0x1]
    %vm3 = vcmask 64512
    %4 = vst.msk [vmem:[#allocation0] sm:$0x1] %vm3, %v2
    %s5 = scalar_lea.vmem %s0, 15
    %v6 = vld [vmem:[%s5] sm:$0x1]
    %7 = vrot.lane.b32.xlu0 %v6, 120
    %v8 = vpop.permute.xlu0 %7
    %vm9 = vcmask 1048512
    %10 = vst.msk [vmem:[#allocation0] sm:$0x1] %vm9, %v8
    %s11 = scalar_lea.vmem %s0, 14
    %v12 = vld [vmem:[%s11] sm:$0x1]
    %13 = vrot.lane.b32.xlu0 %v12, 112
    %v14 = vpop.permute.xlu0 %13
    %vm15 = vcmask 982912
    %16 = vst.msk [vmem:[#allocation0] sm:$0x1] %vm15, %v14
    %s17 = scalar_lea.vmem %s0, 13
    %v18 = vld [vmem:[%s17] sm:$0x1]
    %19 = vrot.lane.b32.xlu0 %v18, 104
    %v20 = vpop.permute.xlu0 %19
    %vm21 = vcmask 917312
    %22 = vst.msk [vmem:[#allocation0] sm:$0x1] %vm21, %v20
    %s23 = scalar_lea.vmem %s0, 12
    %v24 = vld [vmem:[%s23] sm:$0x1]
    %25 = vrot.lane.b32.xlu0 %v24, 96
    %v26 = vpop.permute.xlu0 %25
    %vm27 = vcmask 851712
    %28 = vst.msk [vmem:[#allocation0] sm:$0x1] %vm27, %v26
    %s29 = scalar_lea.vmem %s0, 11
    %v30 = vld [vmem:[%s29] sm:$0x1]
    %31 = vrot.lane.b32.xlu0 %v30, 88
    %v32 = vpop.permute.xlu0 %31
    %vm33 = vcmask 786112
    %34 = vst.msk [vmem:[#allocation0] sm:$0x1] %vm33, %v32
    %s35 = scalar_lea.vmem %s0, 10
    %v36 = vld [vmem:[%s35] sm:$0x1]
    %37 = vrot.lane.b32.xlu0 %v36, 80
    %v38 = vpop.permute.xlu0 %37
    %vm39 = vcmask 720512
    %40 = vst.msk [vmem:[#allocation0] sm:$0x1] %vm39, %v38
    %s41 = scalar_lea.vmem %s0, 9
    %v42 = vld [vmem:[%s41] sm:$0x1]
    %43 = vrot.lane.b32.xlu0 %v42, 72
    %v44 = vpop.permute.xlu0 %43
    %vm45 = vcmask 654912
    %46 = vst.msk [vmem:[#allocation0] sm:$0x1] %vm45, %v44
    %s47 = scalar_lea.vmem %s0, 8
    %v48 = vld [vmem:[%s47] sm:$0x1]
    %49 = vrot.lane.b32.xlu0 %v48, 64
    %v50 = vpop.permute.xlu0 %49
    %vm51 = vcmask 589312
    %52 = vst.msk [vmem:[#allocation0] sm:$0x1] %vm51, %v50
    %s53 = scalar_lea.vmem %s0, 7
    %v54 = vld [vmem:[%s53] sm:$0x1]
    %55 = vrot.lane.b32.xlu0 %v54, 56
    %v56 = vpop.permute.xlu0 %55
    %vm57 = vcmask 523712
    %58 = vst.msk [vmem:[#allocation0] sm:$0x1] %vm57, %v56
    %s59 = scalar_lea.vmem %s0, 6
    %v60 = vld [vmem:[%s59] sm:$0x1]
    %61 = vrot.lane.b32.xlu0 %v60, 48
    %v62 = vpop.permute.xlu0 %61
    %vm63 = vcmask 458112
    %64 = vst.msk [vmem:[#allocation0] sm:$0x1] %vm63, %v62
    %s65 = scalar_lea.vmem %s0, 5
    %v66 = vld [vmem:[%s65] sm:$0x1]
    %67 = vrot.lane.b32.xlu0 %v66, 40
    %v68 = vpop.permute.xlu0 %67
    %vm69 = vcmask 392512
    %70 = vst.msk [vmem:[#allocation0] sm:$0x1] %vm69, %v68
    %s71 = scalar_lea.vmem %s0, 4
    %v72 = vld [vmem:[%s71] sm:$0x1]
    %73 = vrot.lane.b32.xlu0 %v72, 32
    %v74 = vpop.permute.xlu0 %73
    %vm75 = vcmask 326912
    %76 = vst.msk [vmem:[#allocation0] sm:$0x1] %vm75, %v74
    %s77 = scalar_lea.vmem %s0, 3
    %v78 = vld [vmem:[%s77] sm:$0x1]
    %79 = vrot.lane.b32.xlu0 %v78, 24
    %v80 = vpop.permute.xlu0 %79
    %vm81 = vcmask 261312
    %82 = vst.msk [vmem:[#allocation0] sm:$0x1] %vm81, %v80
    %s83 = scalar_lea.vmem %s0, 2
    %v84 = vld [vmem:[%s83] sm:$0x1]
    %85 = vrot.lane.b32.xlu0 %v84, 16
    %v86 = vpop.permute.xlu0 %85
    %vm87 = vcmask 195712
    %88 = vst.msk [vmem:[#allocation0] sm:$0x1] %vm87, %v86
    %s89 = scalar_lea.vmem %s0, 1
    %v90 = vld [vmem:[%s89] sm:$0x1]
    %91 = vrot.lane.b32.xlu0 %v90, 8
    %v92 = vpop.permute.xlu0 %91
    %vm93 = vcmask 130112
    %94 = vst.msk [vmem:[#allocation0] sm:$0x1] %vm93, %v92
    %s96 = ssub.s32 2, 1
    %v97 = vld [vmem:[#allocation0] sm:%s96]
    %s99 = ssub.s32 2, 1
    %100 = vst [vmem:[%s1] sm:%s99] %v97

// kernel: tile.63
$region0: #{tile.63}
  #allocation0 [shape = 's32[1]{0}', space=sflag, size = 0x4, scoped, tag = 'scoped memory for tile.63']
  %s0 = inlined_call_operand.vmem [shape: f32[8], index: 0, kind: input, shape index: {}]
  %s1 = inlined_call_operand.vmem [shape: f32[8,8], index: 1, kind: output, shape index: {}]
  // Predicated region
  $region2: #{tile.63} parent=0 // pred_check
    _
  $region3: #{tile.63} parent=0 // pred_check_branch
    %3 = sbr.rel (0) target = $region5
  $region4: #{tile.63} parent=0 // pred_region
    _
  $region5: #{tile.63} parent=0 // pred_fallthru
    _
  %v4 = vld [vmem:[%s0] ss:$0 sm:$0xff]
  %5 = vst [vmem:[%s1] sm:$0xff] %v4

// kernel: tile.68
$region0: #{tile.68}
  %s0 = inlined_call_operand.vmem [shape: f32[8,8], index: 0, kind: input, shape index: {}]
  %s1 = inlined_call_operand.vmem [shape: f32[1,64], index: 1, kind: output, shape index: {}]
  $region1: #{tile.68} parent=0
    #allocation0 [shape = 'u8[4096]{0}', space=vmem, size = 0x1000, scoped, tag = 'scoped mem for output reshape']
    %v2 = vld [vmem:[%s0] sm:$0x1]
    %vm3 = vcmask 64512
    %4 = vst.msk [vmem:[#allocation0] sm:$0x1] %vm3, %v2
    %s5 = scalar_lea.vmem %s0, 7
    %v6 = vld [vmem:[%s5] sm:$0x1]
    %7 = vrot.lane.b32.xlu0 %v6, 56
    %v8 = vpop.permute.xlu0 %7
    %vm9 = vcmask 523712
    %10 = vst.msk [vmem:[#allocation0] sm:$0x1] %vm9, %v8
    %s11 = scalar_lea.vmem %s0, 6
    %v12 = vld [vmem:[%s11] sm:$0x1]
    %13 = vrot.lane.b32.xlu0 %v12, 48
    %v14 = vpop.permute.xlu0 %13
    %vm15 = vcmask 458112
    %16 = vst.msk [vmem:[#allocation0] sm:$0x1] %vm15, %v14
    %s17 = scalar_lea.vmem %s0, 5
    %v18 = vld [vmem:[%s17] sm:$0x1]
    %19 = vrot.lane.b32.xlu0 %v18, 40
    %v20 = vpop.permute.xlu0 %19
    %vm21 = vcmask 392512
    %22 = vst.msk [vmem:[#allocation0] sm:$0x1] %vm21, %v20
    %s23 = scalar_lea.vmem %s0, 4
    %v24 = vld [vmem:[%s23] sm:$0x1]
    %25 = vrot.lane.b32.xlu0 %v24, 32
    %v26 = vpop.permute.xlu0 %25
    %vm27 = vcmask 326912
    %28 = vst.msk [vmem:[#allocation0] sm:$0x1] %vm27, %v26
    %s29 = scalar_lea.vmem %s0, 3
    %v30 = vld [vmem:[%s29] sm:$0x1]
    %31 = vrot.lane.b32.xlu0 %v30, 24
    %v32 = vpop.permute.xlu0 %31
    %vm33 = vcmask 261312
    %34 = vst.msk [vmem:[#allocation0] sm:$0x1] %vm33, %v32
    %s35 = scalar_lea.vmem %s0, 2
    %v36 = vld [vmem:[%s35] sm:$0x1]
    %37 = vrot.lane.b32.xlu0 %v36, 16
    %v38 = vpop.permute.xlu0 %37
    %vm39 = vcmask 195712
    %40 = vst.msk [vmem:[#allocation0] sm:$0x1] %vm39, %v38
    %s41 = scalar_lea.vmem %s0, 1
    %v42 = vld [vmem:[%s41] sm:$0x1]
    %43 = vrot.lane.b32.xlu0 %v42, 8
    %v44 = vpop.permute.xlu0 %43
    %vm45 = vcmask 130112
    %46 = vst.msk [vmem:[#allocation0] sm:$0x1] %vm45, %v44
    %s48 = ssub.s32 2, 1
    %v49 = vld [vmem:[#allocation0] sm:%s48]
    %s51 = ssub.s32 2, 1
    %52 = vst [vmem:[%s1] sm:%s51] %v49

// kernel: impala_sequential_forward.1
$region0: #{impala_sequential_forward.1}
  #allocation0 [shape = 'u32[]', space=smem, size = 0x4, offset = 0x4, fixed_abs, tag = 'smem constant byte address 0x4 - core index']
  #allocation1 [shape = 'u32[72,128]{1,0:T(1,128)}', space=vmem, size = 0x9000, scoped, tag = 'internal scratch']
  %s0 = inlined_call_operand.vmem [shape: f32[32,64], index: 0, kind: input, shape index: {}]
  %s1 = inlined_call_operand.vmem [shape: f32[192,128], index: 1, kind: input, shape index: {}]
  %s2 = inlined_call_operand.vmem [shape: f32[2,128], index: 2, kind: input, shape index: {}]
  %s3 = inlined_call_operand.vmem [shape: f32[16,32], index: 3, kind: input, shape index: {}]
  %s4 = inlined_call_operand.vmem [shape: f32[128,64], index: 4, kind: input, shape index: {}]
  %s5 = inlined_call_operand.vmem [shape: f32[192,64], index: 5, kind: input, shape index: {}]
  %s6 = inlined_call_operand.vmem [shape: f32[2,64], index: 6, kind: input, shape index: {}]
  %s7 = inlined_call_operand.vmem [shape: f32[192,64], index: 7, kind: input, shape index: {}]
  %s8 = inlined_call_operand.vmem [shape: f32[2,64], index: 8, kind: input, shape index: {}]
  %s9 = inlined_call_operand.vmem [shape: f32[192,64], index: 9, kind: input, shape index: {}]
  %s10 = inlined_call_operand.vmem [shape: f32[2,64], index: 10, kind: input, shape index: {}]
  %s11 = inlined_call_operand.vmem [shape: f32[192,64], index: 11, kind: input, shape index: {}]
  %s12 = inlined_call_operand.vmem [shape: f32[2,64], index: 12, kind: input, shape index: {}]
  %s13 = inlined_call_operand.vmem [shape: f32[16,64], index: 13, kind: output, shape index: {}]
  %s14 = sld [smem:[#allocation0]]
  $region62: #{impala_sequential_forward.1} parent=0
    _
  %s16 = ssub.s32 1, %s14
  %s17 = scalar_select 0, %s16, %s14
  // Predicated region
  $region2: #{impala_sequential_forward.1} parent=0 // pred_check
    _
  $region3: #{impala_sequential_forward.1} parent=0 // pred_check_branch
    %19 = sbr.rel (0) target = $region5
  $region4: #{impala_sequential_forward.1} parent=0 // pred_region
    _
  $region5: #{impala_sequential_forward.1} parent=0 // pred_fallthru
    _
  // Predicated region
  $region6: #{impala_sequential_forward.1} parent=0 // pred_check
    _
  $region7: #{impala_sequential_forward.1} parent=0 // pred_check_branch
    %21 = sbr.rel (0) target = $region9
  $region8: #{impala_sequential_forward.1} parent=0 // pred_region
    _
  $region9: #{impala_sequential_forward.1} parent=0 // pred_fallthru
    _
  // Predicated region
  $region10: #{impala_sequential_forward.1} parent=0 // pred_check
    _
  $region11: #{impala_sequential_forward.1} parent=0 // pred_check_branch
    %23 = sbr.rel (0) target = $region13
  $region12: #{impala_sequential_forward.1} parent=0 // pred_region
    _
  $region13: #{impala_sequential_forward.1} parent=0 // pred_fallthru
    _
  // Predicated region
  $region14: #{impala_sequential_forward.1} parent=0 // pred_check
    _
  $region15: #{impala_sequential_forward.1} parent=0 // pred_check_branch
    %25 = sbr.rel (0) target = $region17
  $region16: #{impala_sequential_forward.1} parent=0 // pred_region
    _
  $region17: #{impala_sequential_forward.1} parent=0 // pred_fallthru
    _
  // Predicated region
  $region18: #{impala_sequential_forward.1} parent=0 // pred_check
    _
  $region19: #{impala_sequential_forward.1} parent=0 // pred_check_branch
    %27 = sbr.rel (0) target = $region21
  $region20: #{impala_sequential_forward.1} parent=0 // pred_region
    _
  $region21: #{impala_sequential_forward.1} parent=0 // pred_fallthru
    _
  // Predicated region
  $region22: #{impala_sequential_forward.1} parent=0 // pred_check
    _
  $region23: #{impala_sequential_forward.1} parent=0 // pred_check_branch
    %29 = sbr.rel (0) target = $region25
  $region24: #{impala_sequential_forward.1} parent=0 // pred_region
    _
  $region25: #{impala_sequential_forward.1} parent=0 // pred_fallthru
    _
  // Predicated region
  $region26: #{impala_sequential_forward.1} parent=0 // pred_check
    _
  $region27: #{impala_sequential_forward.1} parent=0 // pred_check_branch
    %31 = sbr.rel (0) target = $region29
  $region28: #{impala_sequential_forward.1} parent=0 // pred_region
    _
  $region29: #{impala_sequential_forward.1} parent=0 // pred_fallthru
    _
  // Predicated region
  $region30: #{impala_sequential_forward.1} parent=0 // pred_check
    _
  $region31: #{impala_sequential_forward.1} parent=0 // pred_check_branch
    %33 = sbr.rel (0) target = $region33
  $region32: #{impala_sequential_forward.1} parent=0 // pred_region
    _
  $region33: #{impala_sequential_forward.1} parent=0 // pred_fallthru
    _
  // Predicated region
  $region34: #{impala_sequential_forward.1} parent=0 // pred_check
    _
  $region35: #{impala_sequential_forward.1} parent=0 // pred_check_branch
    %35 = sbr.rel (0) target = $region37
  $region36: #{impala_sequential_forward.1} parent=0 // pred_region
    _
  $region37: #{impala_sequential_forward.1} parent=0 // pred_fallthru
    _
  // Predicated region
  $region38: #{impala_sequential_forward.1} parent=0 // pred_check
    _
  $region39: #{impala_sequential_forward.1} parent=0 // pred_check_branch
    %37 = sbr.rel (0) target = $region41
  $region40: #{impala_sequential_forward.1} parent=0 // pred_region
    _
  $region41: #{impala_sequential_forward.1} parent=0 // pred_fallthru
    _
  // Predicated region
  $region42: #{impala_sequential_forward.1} parent=0 // pred_check
    _
  $region43: #{impala_sequential_forward.1} parent=0 // pred_check_branch
    %39 = sbr.rel (0) target = $region45
  $region44: #{impala_sequential_forward.1} parent=0 // pred_region
    _
  $region45: #{impala_sequential_forward.1} parent=0 // pred_fallthru
    _
  // Predicated region
  $region46: #{impala_sequential_forward.1} parent=0 // pred_check
    _
  $region47: #{impala_sequential_forward.1} parent=0 // pred_check_branch
    %41 = sbr.rel (0) target = $region49
  $region48: #{impala_sequential_forward.1} parent=0 // pred_region
    _
  $region49: #{impala_sequential_forward.1} parent=0 // pred_fallthru
    _
  // Predicated region
  $region50: #{impala_sequential_forward.1} parent=0 // pred_check
    _
  $region51: #{impala_sequential_forward.1} parent=0 // pred_check_branch
    %43 = sbr.rel (0) target = $region53
  $region52: #{impala_sequential_forward.1} parent=0 // pred_region
    _
  $region53: #{impala_sequential_forward.1} parent=0 // pred_fallthru
    _
  %v44 = vlaneseq
  %v45 = vshrl.u32 %v44, 7
  %v46 = vadd.s32 %v45, 8
  %v47 = vadd.s32 %v45, 16
  %v48 = vadd.s32 %v45, 24
  %vm49 = vcmp.lt.s32.totalorder %v45, 0
  %v50 = vsub.s32 0, %v45
  %v51 = vsel %vm49, %v50, %v45
  %v52 = vshrl.u32 %v51, 4
  %v53 = vand.u32 %v51, 15
  %v54 = vsub.s32 0, %v53
  %v55 = vsel %vm49, %v54, %v53
  %vm56 = vcmp.lt.s32.totalorder %v46, 0
  %v57 = vsub.s32 0, %v46
  %v58 = vsel %vm56, %v57, %v46
  %v59 = vshrl.u32 %v58, 4
  %v60 = vand.u32 %v58, 15
  %v61 = vsub.s32 0, %v60
  %v62 = vsel %vm56, %v61, %v60
  %vm63 = vcmp.lt.s32.totalorder %v47, 0
  %v64 = vsub.s32 0, %v47
  %v65 = vsel %vm63, %v64, %v47
  %v66 = vshrl.u32 %v65, 4
  %v67 = vand.u32 %v65, 15
  %v68 = vsub.s32 0, %v67
  %v69 = vsel %vm63, %v68, %v67
  %vm70 = vcmp.lt.s32.totalorder %v48, 0
  %v71 = vsub.s32 0, %v48
  %v72 = vsel %vm70, %v71, %v48
  %v73 = vshrl.u32 %v72, 4
  %v74 = vand.u32 %v72, 15
  %v75 = vsub.s32 0, %v74
  %v76 = vsel %vm70, %v75, %v74
  %vm77 = vcmp.ne.s32.totalorder %v55, 0
  %vm78 = vcmp.ne.s32.totalorder %v62, 0
  %vm79 = vcmp.ne.s32.totalorder %v69, 0
  %vm80 = vcmp.ne.s32.totalorder %v76, 0
  %vm81 = vcmp.lt.s32.totalorder %v55, 0
  %vm82 = vcmp.lt.s32.totalorder %v62, 0
  %vm83 = vcmp.lt.s32.totalorder %v69, 0
  %vm84 = vcmp.lt.s32.totalorder %v76, 0
  %vm85 = vmand %vm81, %vm77
  %vm86 = vmand %vm82, %vm78
  %vm87 = vmand %vm83, %vm79
  %vm88 = vmand %vm84, %vm80
  %v89 = vadd.s32 %v55, 16
  %v90 = vadd.s32 %v62, 16
  %v91 = vadd.s32 %v69, 16
  %v92 = vadd.s32 %v76, 16
  %v93 = vsel %vm85, %v89, %v55
  %v94 = vsel %vm86, %v90, %v62
  %v95 = vsel %vm87, %v91, %v69
  %v96 = vsel %vm88, %v92, %v76
  %vm97 = vcmp.ne.s32.totalorder %v93, 0
  %vm98 = vcmp.ne.s32.totalorder %v94, 0
  %vm99 = vcmp.ne.s32.totalorder %v95, 0
  %vm100 = vcmp.ne.s32.totalorder %v96, 0
  %vm101 = vcmp.ne.s32.totalorder %v93, 15
  %vm102 = vcmp.ne.s32.totalorder %v94, 15
  %vm103 = vcmp.ne.s32.totalorder %v95, 15
  %vm104 = vcmp.ne.s32.totalorder %v96, 15
  %vm105 = vcmp.lt.s32.totalorder %v45, 0
  %v106 = vsub.s32 0, %v45
  %v107 = vsel %vm105, %v106, %v45
  %v108 = vshrl.u32 %v107, 3
  %v109 = vand.u32 %v107, 7
  %v110 = vsub.s32 0, %v109
  %v111 = vsel %vm105, %v110, %v109
  %vm112 = vcmp.lt.s32.totalorder %v46, 0
  %v113 = vsub.s32 0, %v46
  %v114 = vsel %vm112, %v113, %v46
  %v115 = vshrl.u32 %v114, 3
  %v116 = vand.u32 %v114, 7
  %v117 = vsub.s32 0, %v116
  %v118 = vsel %vm112, %v117, %v116
  %vm119 = vcmp.ne.s32.totalorder %v111, 0
  %vm120 = vcmp.ne.s32.totalorder %v118, 0
  %vm121 = vcmp.lt.s32.totalorder %v111, 0
  %vm122 = vcmp.lt.s32.totalorder %v118, 0
  %vm123 = vmand %vm121, %vm119
  %vm124 = vmand %vm122, %vm120
  %v125 = vadd.s32 %v111, 8
  %v126 = vadd.s32 %v118, 8
  %v127 = vsel %vm123, %v125, %v111
  %v128 = vsel %vm124, %v126, %v118
  %vm129 = vcmp.ne.s32.totalorder %v127, 0
  %vm130 = vcmp.ne.s32.totalorder %v128, 0
  %vm131 = vcmp.ne.s32.totalorder %v127, 7
  %vm132 = vcmp.ne.s32.totalorder %v128, 7
  %v133 = vld [vmem:[%s0] sm:$0xff]
  %v134 = vld [vmem:[%s0 + $0x8] sm:$0xff]
  %v135 = vld [vmem:[%s0 + $0x10] sm:$0xff]
  %v136 = vld [vmem:[%s0 + $0x18] sm:$0xff]
  %v137 = vrot.slane %v133, 7
  %v138 = vrot.slane %v134, 7
  %v139 = vrot.slane %v135, 7
  %v140 = vrot.slane %v136, 7
  %vm141 = vcmp.lt.s32.totalorder %v45, 1
  %v142 = vsel %vm141, %v139, %v140
  %v143 = vsel %vm141, %v138, %v139
  %v144 = vsel %vm141, %v137, %v138
  %v145 = vsel %vm141, %v140, %v137
  %v146 = vsel %vm97, 1, 0
  %v147 = vsel %vm98, 1, 0
  %v148 = vsel %vm99, 1, 0
  %v149 = vsel %vm100, 1, 0
  %vm150 = vcmp.eq.s32.totalorder %v146, 1
  %vm151 = vcmp.eq.s32.totalorder %v147, 1
  %vm152 = vcmp.eq.s32.totalorder %v148, 1
  %vm153 = vcmp.eq.s32.totalorder %v149, 1
  %v154 = vsel %vm150, %v145, 0.0
  %v155 = vsel %vm151, %v144, 0.0
  %v156 = vsel %vm152, %v143, 0.0
  %v157 = vsel %vm153, %v142, 0.0
  %v158 = vrot.slane %v133, 1
  %v159 = vrot.slane %v134, 1
  %v160 = vrot.slane %v135, 1
  %v161 = vrot.slane %v136, 1
  %vm162 = vcmp.lt.s32.totalorder %v45, 7
  %v163 = vsel %vm162, %v160, %v161
  %v164 = vsel %vm162, %v159, %v160
  %v165 = vsel %vm162, %v158, %v159
  %v166 = vsel %vm162, %v161, %v158
  %v167 = vsel %vm101, 1, 0
  %v168 = vsel %vm102, 1, 0
  %v169 = vsel %vm103, 1, 0
  %v170 = vsel %vm104, 1, 0
  %vm171 = vcmp.eq.s32.totalorder %v167, 1
  %vm172 = vcmp.eq.s32.totalorder %v168, 1
  %vm173 = vcmp.eq.s32.totalorder %v169, 1
  %vm174 = vcmp.eq.s32.totalorder %v170, 1
  %v175 = vsel %vm171, %v165, 0.0
  %v176 = vsel %vm172, %v164, 0.0
  %v177 = vsel %vm173, %v163, 0.0
  %v178 = vsel %vm174, %v166, 0.0
  %183 = vrot.lane.b32.xlu0 %v133, 64
  %v184 = vpop.permute.xlu0 %183
  %185 = vrot.lane.b32.xlu0 %v134, 64
  %v186 = vpop.permute.xlu0 %185
  %187 = vrot.lane.b32.xlu0 %v135, 64
  %v188 = vpop.permute.xlu0 %187
  %189 = vrot.lane.b32.xlu0 %v136, 64
  %v190 = vpop.permute.xlu0 %189
  %vm195 = vcmask 523264
  %v196 = vsel %vm195, %v154, %v184
  %v197 = vsel %vm195, %v155, %v186
  %v198 = vsel %vm195, %v156, %v188
  %v199 = vsel %vm195, %v157, %v190
  %v200 = vld [vmem:[%s1] sm:$0xff]
  %v201 = vld [vmem:[%s1 + $0x8] sm:$0xff]
  %v202 = vld [vmem:[%s1 + $0x10] sm:$0xff]
  %v203 = vld [vmem:[%s1 + $0x18] sm:$0xff]
  %v204 = vld [vmem:[%s1 + $0x20] sm:$0xff]
  %v205 = vld [vmem:[%s1 + $0x28] sm:$0xff]
  %v206 = vld [vmem:[%s1 + $0x30] sm:$0xff]
  %v207 = vld [vmem:[%s1 + $0x38] sm:$0xff]
  %v208 = vld [vmem:[%s1 + $0x40] sm:$0xff]
  %v209 = vld [vmem:[%s1 + $0x48] sm:$0xff]
  %v210 = vld [vmem:[%s1 + $0x50] sm:$0xff]
  %v211 = vld [vmem:[%s1 + $0x58] sm:$0xff]
  %v212 = vld [vmem:[%s1 + $0x60] sm:$0xff]
  %v213 = vld [vmem:[%s1 + $0x68] sm:$0xff]
  %v214 = vld [vmem:[%s1 + $0x70] sm:$0xff]
  %v215 = vld [vmem:[%s1 + $0x78] sm:$0xff]
  %v216 = vld [vmem:[%s1 + $0x80] sm:$0xff]
  %v217 = vld [vmem:[%s1 + $0x88] sm:$0xff]
  %v218 = vld [vmem:[%s1 + $0x90] sm:$0xff]
  %v219 = vld [vmem:[%s1 + $0x98] sm:$0xff]
  %v220 = vld [vmem:[%s1 + $0xa0] sm:$0xff]
  %v221 = vld [vmem:[%s1 + $0xa8] sm:$0xff]
  %v222 = vld [vmem:[%s1 + $0xb0] sm:$0xff]
  %v223 = vld [vmem:[%s1 + $0xb8] sm:$0xff]
  %v225 = vsel %vm195, %v175, 0
  %v228 = vsel %vm195, %v176, 0
  %v231 = vsel %vm195, %v177, 0
  %v234 = vsel %vm195, %v178, 0
  %236 = vmatpush.msra.mxu0 %v215
  %237 = vmatpush.msra.mxu0 %v214
  %238 = vmatpush.msra.mxu0 %v213
  %239 = vmatpush.msra.mxu0 %v212
  %240 = vmatpush.msra.mxu0 %v211
  %241 = vmatpush.msra.mxu0 %v210
  %242 = vmatpush.msra.mxu0 %v209
  %243 = vmatpush.msra.mxu0 %v208
  %244 = vmatpush.msra.mxu0 %v207
  %245 = vmatpush.msra.mxu0 %v206
  %246 = vmatpush.msra.mxu0 %v205
  %247 = vmatpush.msra.mxu0 %v204
  %248 = vmatpush.msra.mxu0 %v203
  %249 = vmatpush.msra.mxu0 %v202
  %250 = vmatpush.msra.mxu0 %v201
  %251 = vmatpush.msra.mxu0 %v200
  %252 = vmatmul.f32.gmra.mxu0 %v196
  %v253 = vpop.f32.mrf.mxu0
  %v254 = vadd.f32 0.0, %v253
  %255 = vmatmul.f32.gmra.mxu0 %v197
  %v256 = vpop.f32.mrf.mxu0
  %v257 = vadd.f32 0.0, %v256
  %258 = vmatmul.f32.gmra.mxu0 %v198
  %v259 = vpop.f32.mrf.mxu0
  %v260 = vadd.f32 0.0, %v259
  %261 = vmatmul.f32.gmra.mxu0 %v199
  %v262 = vpop.f32.mrf.mxu0
  %v263 = vadd.f32 0.0, %v262
  %264 = vdwg.mxu0
  %265 = vmatpush.msra.mxu0 0.0
  %266 = vmatpush.msra.mxu0 0.0
  %267 = vmatpush.msra.mxu0 0.0
  %268 = vmatpush.msra.mxu0 0.0
  %269 = vmatpush.msra.mxu0 0.0
  %270 = vmatpush.msra.mxu0 0.0
  %271 = vmatpush.msra.mxu0 0.0
  %272 = vmatpush.msra.mxu0 0.0
  %273 = vmatpush.msra.mxu0 %v223
  %274 = vmatpush.msra.mxu0 %v222
  %275 = vmatpush.msra.mxu0 %v221
  %276 = vmatpush.msra.mxu0 %v220
  %277 = vmatpush.msra.mxu0 %v219
  %278 = vmatpush.msra.mxu0 %v218
  %279 = vmatpush.msra.mxu0 %v217
  %280 = vmatpush.msra.mxu0 %v216
  %281 = vmatmul.f32.gmra.mxu0 %v225
  %v282 = vpop.f32.mrf.mxu0
  %v283 = vadd.f32 %v254, %v282
  %284 = vmatmul.f32.gmra.mxu0 %v228
  %v285 = vpop.f32.mrf.mxu0
  %v286 = vadd.f32 %v257, %v285
  %287 = vmatmul.f32.gmra.mxu0 %v231
  %v288 = vpop.f32.mrf.mxu0
  %v289 = vadd.f32 %v260, %v288
  %290 = vmatmul.f32.gmra.mxu0 %v234
  %v291 = vpop.f32.mrf.mxu0
  %v292 = vadd.f32 %v263, %v291
  %293 = vdwg.mxu0
  %v294 = vld [vmem:[%s2] sm:$0x1]
  %v295 = vld [vmem:[%s2 + $0x1] sm:$0x1]
  %v296 = vadd.f32 %v283, %v286
  %v297 = vadd.f32 %v296, %v289
  %v298 = vadd.f32 %v297, %v292
  %v299 = vrot.slane %v298, 4
  %v300 = vadd.f32 %v298, %v299
  %v301 = vrot.slane %v300, 2
  %v302 = vadd.f32 %v300, %v301
  %v303 = vrot.slane %v302, 1
  %v304 = vadd.f32 %v302, %v303
  %305 = vrot.lane.b32.xlu0 %v304, 8
  %v306 = vpop.permute.xlu0 %305
  %v307 = vadd.f32 %v304, %v306
  %308 = vrot.lane.b32.xlu0 %v307, 16
  %v309 = vpop.permute.xlu0 %308
  %v310 = vadd.f32 %v307, %v309
  %311 = vrot.lane.b32.xlu0 %v310, 32
  %v312 = vpop.permute.xlu0 %311
  %v313 = vadd.f32 %v310, %v312
  %314 = vrot.lane.b32.xlu0 %v313, 64
  %v315 = vpop.permute.xlu0 %314
  %v316 = vadd.f32 %v313, %v315
  %v317 = vmul.f32 %v283, %v283
  %v318 = vmul.f32 %v286, %v286
  %v319 = vmul.f32 %v289, %v289
  %v320 = vmul.f32 %v292, %v292
  %v321 = vadd.f32 %v317, %v318
  %v322 = vadd.f32 %v321, %v319
  %v323 = vadd.f32 %v322, %v320
  %v324 = vrot.slane %v323, 4
  %v325 = vadd.f32 %v323, %v324
  %v326 = vrot.slane %v325, 2
  %v327 = vadd.f32 %v325, %v326
  %v328 = vrot.slane %v327, 1
  %v329 = vadd.f32 %v327, %v328
  %330 = vrot.lane.b32.xlu0 %v329, 8
  %v331 = vpop.permute.xlu0 %330
  %v332 = vadd.f32 %v329, %v331
  %333 = vrot.lane.b32.xlu0 %v332, 16
  %v334 = vpop.permute.xlu0 %333
  %v335 = vadd.f32 %v332, %v334
  %336 = vrot.lane.b32.xlu0 %v335, 32
  %v337 = vpop.permute.xlu0 %336
  %v338 = vadd.f32 %v335, %v337
  %339 = vrot.lane.b32.xlu0 %v338, 64
  %v340 = vpop.permute.xlu0 %339
  %v341 = vadd.f32 %v338, %v340
  %v342 = vmul.f32 %v316, 0.001953125
  %v343 = vmul.f32 %v341, 0.001953125
  %v344 = vmul.f32 %v342, %v342
  %v345 = vsub.f32 %v343, %v344
  %v346 = vadd.f32 %v345, 1e-05
  %v347 = vrsqrt.pop %v346
  %v348 = vmul.f32 %v347, %v346
  %v349 = vmul.f32 %v348, %v347
  %v350 = vmul.f32 0.5, %v349
  %v351 = vsub.f32 1.5, %v350
  %v352 = vmul.f32 %v347, %v351
  %vm353 = vweird.f32 %v346
  %vm354 = vweird.f32 %v347
  %vm355 = vmor %vm353, %vm354
  %v356 = vsel %vm355, %v347, %v352
  %v357 = vmul.f32 %v356, %v294
  %v358 = vmul.f32 %v342, %v357
  %v359 = vsub.f32 %v295, %v358
  %v360 = vperm.slane %v357, 0
  %v361 = vmul.f32 %v283, %v360
  %v362 = vmul.f32 %v286, %v360
  %v363 = vmul.f32 %v289, %v360
  %v364 = vmul.f32 %v292, %v360
  %v365 = vperm.slane %v359, 0
  %v366 = vadd.f32 %v361, %v365
  %v367 = vadd.f32 %v362, %v365
  %v368 = vadd.f32 %v363, %v365
  %v369 = vadd.f32 %v364, %v365
  %v370 = vrot.slane %v366, 7
  %v371 = vrot.slane %v367, 7
  %v372 = vrot.slane %v368, 7
  %v373 = vrot.slane %v369, 7
  %v374 = vsel %vm141, %v372, %v373
  %v375 = vsel %vm141, %v371, %v372
  %v376 = vsel %vm141, %v370, %v371
  %v377 = vsel %vm141, %v373, %v370
  %v378 = vsel %vm150, %v377, -3e+38
  %v379 = vsel %vm151, %v376, -3e+38
  %v380 = vsel %vm152, %v375, -3e+38
  %v381 = vsel %vm153, %v374, -3e+38
  %v382 = vrot.slane %v366, 1
  %v383 = vrot.slane %v367, 1
  %v384 = vrot.slane %v368, 1
  %v385 = vrot.slane %v369, 1
  %v386 = vsel %vm162, %v384, %v385
  %v387 = vsel %vm162, %v383, %v384
  %v388 = vsel %vm162, %v382, %v383
  %v389 = vsel %vm162, %v385, %v382
  %v390 = vsel %vm171, %v388, -3e+38
  %v391 = vsel %vm172, %v387, -3e+38
  %v392 = vsel %vm173, %v386, -3e+38
  %v393 = vsel %vm174, %v389, -3e+38
  %v394 = vmax.f32 %v378, %v366
  %v395 = vmax.f32 %v379, %v367
  %v396 = vmax.f32 %v380, %v368
  %v397 = vmax.f32 %v381, %v369
  %v398 = vmax.f32 %v394, %v390
  %v399 = vmax.f32 %v395, %v391
  %v400 = vmax.f32 %v396, %v392
  %v401 = vmax.f32 %v397, %v393
  %v402 = vlaneseq
  %v403 = vand.u32 %v402, 127
  %vm404 = vcmp.ge.s32.totalorder %v403, 8
  %405 = vrot.lane.b32.xlu0 %v398, 8
  %v406 = vpop.permute.xlu0 %405
  %407 = vrot.lane.b32.xlu0 %v399, 8
  %v408 = vpop.permute.xlu0 %407
  %409 = vrot.lane.b32.xlu0 %v400, 8
  %v410 = vpop.permute.xlu0 %409
  %411 = vrot.lane.b32.xlu0 %v401, 8
  %v412 = vpop.permute.xlu0 %411
  %v413 = vsel %vm404, 1, 0
  %vm414 = vcmp.eq.s32.totalorder %v413, 1
  %v415 = vsel %vm414, %v406, -3e+38
  %v416 = vsel %vm414, %v408, -3e+38
  %v417 = vsel %vm414, %v410, -3e+38
  %v418 = vsel %vm414, %v412, -3e+38
  %vm419 = vcmp.lt.s32.totalorder %v403, 120
  %420 = vrot.lane.b32.xlu0 %v398, 120
  %v421 = vpop.permute.xlu0 %420
  %422 = vrot.lane.b32.xlu0 %v399, 120
  %v423 = vpop.permute.xlu0 %422
  %424 = vrot.lane.b32.xlu0 %v400, 120
  %v425 = vpop.permute.xlu0 %424
  %426 = vrot.lane.b32.xlu0 %v401, 120
  %v427 = vpop.permute.xlu0 %426
  %v428 = vsel %vm419, 1, 0
  %vm429 = vcmp.eq.s32.totalorder %v428, 1
  %v430 = vsel %vm429, %v421, -3e+38
  %v431 = vsel %vm429, %v423, -3e+38
  %v432 = vsel %vm429, %v425, -3e+38
  %v433 = vsel %vm429, %v427, -3e+38
  %v434 = vmax.f32 %v415, %v398
  %v435 = vmax.f32 %v416, %v399
  %v436 = vmax.f32 %v417, %v400
  %v437 = vmax.f32 %v418, %v401
  %v438 = vmax.f32 %v434, %v430
  %v439 = vmax.f32 %v435, %v431
  %v440 = vmax.f32 %v436, %v432
  %v441 = vmax.f32 %v437, %v433
  %v442 = vld [vmem:[%s3] sm:$0xff]
  %v443 = vld [vmem:[%s3 + $0x8] sm:$0xff]
  %vm444 = vcmask 261120
  %v446 = vsel %vm444, %v442, 0
  %v449 = vsel %vm444, %v443, 0
  %451 = vmatpush.msra.mxu0 0.0
  %452 = vmatpush.msra.mxu0 0.0
  %453 = vmatpush.msra.mxu0 0.0
  %454 = vmatpush.msra.mxu0 0.0
  %455 = vmatpush.msra.mxu0 0.0
  %456 = vmatpush.msra.mxu0 0.0
  %457 = vmatpush.msra.mxu0 0.0
  %458 = vmatpush.msra.mxu0 0.0
  %459 = vmatpush.msra.mxu0 0.0
  %460 = vmatpush.msra.mxu0 0.0
  %461 = vmatpush.msra.mxu0 0.0
  %462 = vmatpush.msra.mxu0 0.0
  %463 = vmatpush.msra.mxu0 %v441
  %464 = vmatpush.msra.mxu0 %v440
  %465 = vmatpush.msra.mxu0 %v439
  %466 = vmatpush.msra.mxu0 %v438
  %467 = vmatmul.f32.gmra.mxu0 %v446
  %v468 = vpop.f32.mrf.mxu0
  %v469 = vadd.f32 0.0, %v468
  %470 = vmatmul.f32.gmra.mxu0 %v449
  %v471 = vpop.f32.mrf.mxu0
  %v472 = vadd.f32 0.0, %v471
  %473 = vdwg.mxu0
  %v474 = vld [vmem:[%s4] sm:$0xff]
  %v475 = vld [vmem:[%s4 + $0x8] sm:$0xff]
  %v476 = vld [vmem:[%s4 + $0x10] sm:$0xff]
  %v477 = vld [vmem:[%s4 + $0x18] sm:$0xff]
  %v478 = vld [vmem:[%s4 + $0x20] sm:$0xff]
  %v479 = vld [vmem:[%s4 + $0x28] sm:$0xff]
  %v480 = vld [vmem:[%s4 + $0x30] sm:$0xff]
  %v481 = vld [vmem:[%s4 + $0x38] sm:$0xff]
  %v482 = vld [vmem:[%s4 + $0x40] sm:$0xff]
  %v483 = vld [vmem:[%s4 + $0x48] sm:$0xff]
  %v484 = vld [vmem:[%s4 + $0x50] sm:$0xff]
  %v485 = vld [vmem:[%s4 + $0x58] sm:$0xff]
  %v486 = vld [vmem:[%s4 + $0x60] sm:$0xff]
  %v487 = vld [vmem:[%s4 + $0x68] sm:$0xff]
  %v488 = vld [vmem:[%s4 + $0x70] sm:$0xff]
  %v489 = vld [vmem:[%s4 + $0x78] sm:$0xff]
  %490 = vmatpush.msra.mxu0 %v489
  %491 = vmatpush.msra.mxu0 %v488
  %492 = vmatpush.msra.mxu0 %v487
  %493 = vmatpush.msra.mxu0 %v486
  %494 = vmatpush.msra.mxu0 %v485
  %495 = vmatpush.msra.mxu0 %v484
  %496 = vmatpush.msra.mxu0 %v483
  %497 = vmatpush.msra.mxu0 %v482
  %498 = vmatpush.msra.mxu0 %v481
  %499 = vmatpush.msra.mxu0 %v480
  %500 = vmatpush.msra.mxu0 %v479
  %501 = vmatpush.msra.mxu0 %v478
  %502 = vmatpush.msra.mxu0 %v477
  %503 = vmatpush.msra.mxu0 %v476
  %504 = vmatpush.msra.mxu0 %v475
  %505 = vmatpush.msra.mxu0 %v474
  %506 = vmatmul.f32.gmra.mxu0 %v469
  %v507 = vpop.f32.mrf.mxu0
  %v508 = vadd.f32 0.0, %v507
  %509 = vmatmul.f32.gmra.mxu0 %v472
  %v510 = vpop.f32.mrf.mxu0
  %v511 = vadd.f32 0.0, %v510
  %512 = vdwg.mxu0
  %vm513 = vcmp.gt.f32.partialorder %v508, 0.0
  %vm514 = vcmp.gt.f32.partialorder %v511, 0.0
  %v515 = vmul.f32 %v508, 1.442695
  %v516 = vpow.pop %v515
  %v517 = vmul.f32 %v511, 1.442695
  %v518 = vpow.pop %v517
  %v519 = vsub.f32 %v516, 1.0
  %v520 = vsub.f32 %v518, 1.0
  %v521 = vsel %vm513, %v508, %v519
  %v522 = vsel %vm514, %v511, %v520
  %v523 = vrot.slane %v521, 7
  %v524 = vrot.slane %v522, 7
  %v525 = vsel %vm141, %v523, %v524
  %v526 = vsel %vm141, %v524, %v523
  %v527 = vsel %vm129, 1, 0
  %v528 = vsel %vm130, 1, 0
  %vm529 = vcmp.eq.s32.totalorder %v527, 1
  %vm530 = vcmp.eq.s32.totalorder %v528, 1
  %v531 = vsel %vm529, %v526, 0.0
  %v532 = vsel %vm530, %v525, 0.0
  %v533 = vrot.slane %v521, 1
  %v534 = vrot.slane %v522, 1
  %v535 = vsel %vm162, %v533, %v534
  %v536 = vsel %vm162, %v534, %v533
  %v537 = vsel %vm131, 1, 0
  %v538 = vsel %vm132, 1, 0
  %vm539 = vcmp.eq.s32.totalorder %v537, 1
  %vm540 = vcmp.eq.s32.totalorder %v538, 1
  %v541 = vsel %vm539, %v535, 0.0
  %v542 = vsel %vm540, %v536, 0.0
  %545 = vrot.lane.b32.xlu0 %v521, 64
  %v546 = vpop.permute.xlu0 %545
  %547 = vrot.lane.b32.xlu0 %v522, 64
  %v548 = vpop.permute.xlu0 %547
  %v551 = vsel %vm195, %v531, %v546
  %v552 = vsel %vm195, %v532, %v548
  %v553 = vld [vmem:[%s5] sm:$0xff]
  %v554 = vld [vmem:[%s5 + $0x8] sm:$0xff]
  %v555 = vld [vmem:[%s5 + $0x10] sm:$0xff]
  %v556 = vld [vmem:[%s5 + $0x18] sm:$0xff]
  %v557 = vld [vmem:[%s5 + $0x20] sm:$0xff]
  %v558 = vld [vmem:[%s5 + $0x28] sm:$0xff]
  %v559 = vld [vmem:[%s5 + $0x30] sm:$0xff]
  %v560 = vld [vmem:[%s5 + $0x38] sm:$0xff]
  %v561 = vld [vmem:[%s5 + $0x40] sm:$0xff]
  %v562 = vld [vmem:[%s5 + $0x48] sm:$0xff]
  %v563 = vld [vmem:[%s5 + $0x50] sm:$0xff]
  %v564 = vld [vmem:[%s5 + $0x58] sm:$0xff]
  %v565 = vld [vmem:[%s5 + $0x60] sm:$0xff]
  %v566 = vld [vmem:[%s5 + $0x68] sm:$0xff]
  %v567 = vld [vmem:[%s5 + $0x70] sm:$0xff]
  %v568 = vld [vmem:[%s5 + $0x78] sm:$0xff]
  %v569 = vld [vmem:[%s5 + $0x80] sm:$0xff]
  %v570 = vld [vmem:[%s5 + $0x88] sm:$0xff]
  %v571 = vld [vmem:[%s5 + $0x90] sm:$0xff]
  %v572 = vld [vmem:[%s5 + $0x98] sm:$0xff]
  %v573 = vld [vmem:[%s5 + $0xa0] sm:$0xff]
  %v574 = vld [vmem:[%s5 + $0xa8] sm:$0xff]
  %v575 = vld [vmem:[%s5 + $0xb0] sm:$0xff]
  %v576 = vld [vmem:[%s5 + $0xb8] sm:$0xff]
  %v578 = vsel %vm195, %v541, 0
  %v581 = vsel %vm195, %v542, 0
  %583 = vmatpush.msra.mxu0 %v568
  %584 = vmatpush.msra.mxu0 %v567
  %585 = vmatpush.msra.mxu0 %v566
  %586 = vmatpush.msra.mxu0 %v565
  %587 = vmatpush.msra.mxu0 %v564
  %588 = vmatpush.msra.mxu0 %v563
  %589 = vmatpush.msra.mxu0 %v562
  %590 = vmatpush.msra.mxu0 %v561
  %591 = vmatpush.msra.mxu0 %v560
  %592 = vmatpush.msra.mxu0 %v559
  %593 = vmatpush.msra.mxu0 %v558
  %594 = vmatpush.msra.mxu0 %v557
  %595 = vmatpush.msra.mxu0 %v556
  %596 = vmatpush.msra.mxu0 %v555
  %597 = vmatpush.msra.mxu0 %v554
  %598 = vmatpush.msra.mxu0 %v553
  %599 = vmatmul.f32.gmra.mxu0 %v551
  %v600 = vpop.f32.mrf.mxu0
  %v601 = vadd.f32 0.0, %v600
  %602 = vmatmul.f32.gmra.mxu0 %v552
  %v603 = vpop.f32.mrf.mxu0
  %v604 = vadd.f32 0.0, %v603
  %605 = vdwg.mxu0
  %606 = vmatpush.msra.mxu0 0.0
  %607 = vmatpush.msra.mxu0 0.0
  %608 = vmatpush.msra.mxu0 0.0
  %609 = vmatpush.msra.mxu0 0.0
  %610 = vmatpush.msra.mxu0 0.0
  %611 = vmatpush.msra.mxu0 0.0
  %612 = vmatpush.msra.mxu0 0.0
  %613 = vmatpush.msra.mxu0 0.0
  %614 = vmatpush.msra.mxu0 %v576
  %615 = vmatpush.msra.mxu0 %v575
  %616 = vmatpush.msra.mxu0 %v574
  %617 = vmatpush.msra.mxu0 %v573
  %618 = vmatpush.msra.mxu0 %v572
  %619 = vmatpush.msra.mxu0 %v571
  %620 = vmatpush.msra.mxu0 %v570
  %621 = vmatpush.msra.mxu0 %v569
  %622 = vmatmul.f32.gmra.mxu0 %v578
  %v623 = vpop.f32.mrf.mxu0
  %v624 = vadd.f32 %v601, %v623
  %625 = vmatmul.f32.gmra.mxu0 %v581
  %v626 = vpop.f32.mrf.mxu0
  %v627 = vadd.f32 %v604, %v626
  %628 = vdwg.mxu0
  %v629 = vld [vmem:[%s6] sm:$0x1]
  %v630 = vld [vmem:[%s6 + $0x1] sm:$0x1]
  %v631 = vsel %vm195, %v624, 0.0
  %v632 = vsel %vm195, %v627, 0.0
  %v633 = vadd.f32 %v631, %v632
  %v634 = vrot.slane %v633, 4
  %v635 = vadd.f32 %v633, %v634
  %v636 = vrot.slane %v635, 2
  %v637 = vadd.f32 %v635, %v636
  %v638 = vrot.slane %v637, 1
  %v639 = vadd.f32 %v637, %v638
  %v640 = vsel %vm195, %v639, 0.0
  %641 = vrot.lane.b32.xlu0 %v640, 8
  %v642 = vpop.permute.xlu0 %641
  %v643 = vadd.f32 %v640, %v642
  %644 = vrot.lane.b32.xlu0 %v643, 16
  %v645 = vpop.permute.xlu0 %644
  %v646 = vadd.f32 %v643, %v645
  %647 = vrot.lane.b32.xlu0 %v646, 32
  %v648 = vpop.permute.xlu0 %647
  %v649 = vadd.f32 %v646, %v648
  %650 = vrot.lane.b32.xlu0 %v649, 64
  %v651 = vpop.permute.xlu0 %650
  %v652 = vadd.f32 %v649, %v651
  %v653 = vmul.f32 %v624, %v624
  %v654 = vmul.f32 %v627, %v627
  %v655 = vsel %vm195, %v653, 0.0
  %v656 = vsel %vm195, %v654, 0.0
  %v657 = vadd.f32 %v655, %v656
  %v658 = vrot.slane %v657, 4
  %v659 = vadd.f32 %v657, %v658
  %v660 = vrot.slane %v659, 2
  %v661 = vadd.f32 %v659, %v660
  %v662 = vrot.slane %v661, 1
  %v663 = vadd.f32 %v661, %v662
  %v664 = vsel %vm195, %v663, 0.0
  %665 = vrot.lane.b32.xlu0 %v664, 8
  %v666 = vpop.permute.xlu0 %665
  %v667 = vadd.f32 %v664, %v666
  %668 = vrot.lane.b32.xlu0 %v667, 16
  %v669 = vpop.permute.xlu0 %668
  %v670 = vadd.f32 %v667, %v669
  %671 = vrot.lane.b32.xlu0 %v670, 32
  %v672 = vpop.permute.xlu0 %671
  %v673 = vadd.f32 %v670, %v672
  %674 = vrot.lane.b32.xlu0 %v673, 64
  %v675 = vpop.permute.xlu0 %674
  %v676 = vadd.f32 %v673, %v675
  %v677 = vmul.f32 %v652, 0.0078125
  %v678 = vmul.f32 %v676, 0.0078125
  %v679 = vmul.f32 %v677, %v677
  %v680 = vsub.f32 %v678, %v679
  %v681 = vadd.f32 %v680, 1e-05
  %v682 = vrsqrt.pop %v681
  %v683 = vmul.f32 %v682, %v681
  %v684 = vmul.f32 %v683, %v682
  %v685 = vmul.f32 0.5, %v684
  %v686 = vsub.f32 1.5, %v685
  %v687 = vmul.f32 %v682, %v686
  %vm688 = vweird.f32 %v681
  %vm689 = vweird.f32 %v682
  %vm690 = vmor %vm688, %vm689
  %v691 = vsel %vm690, %v682, %v687
  %v692 = vmul.f32 %v691, %v629
  %v693 = vmul.f32 %v677, %v692
  %v694 = vsub.f32 %v630, %v693
  %v695 = vperm.slane %v692, 0
  %v696 = vmul.f32 %v624, %v695
  %v697 = vmul.f32 %v627, %v695
  %v698 = vperm.slane %v694, 0
  %v699 = vadd.f32 %v696, %v698
  %v700 = vadd.f32 %v697, %v698
  %vm701 = vcmp.gt.f32.partialorder %v699, 0.0
  %vm702 = vcmp.gt.f32.partialorder %v700, 0.0
  %v703 = vmul.f32 %v699, 1.442695
  %v704 = vpow.pop %v703
  %v705 = vmul.f32 %v700, 1.442695
  %v706 = vpow.pop %v705
  %v707 = vsub.f32 %v704, 1.0
  %v708 = vsub.f32 %v706, 1.0
  %v709 = vsel %vm701, %v699, %v707
  %v710 = vsel %vm702, %v700, %v708
  %v711 = vrot.slane %v709, 7
  %v712 = vrot.slane %v710, 7
  %v713 = vsel %vm141, %v711, %v712
  %v714 = vsel %vm141, %v712, %v711
  %v715 = vsel %vm529, %v714, 0.0
  %v716 = vsel %vm530, %v713, 0.0
  %v717 = vrot.slane %v709, 1
  %v718 = vrot.slane %v710, 1
  %v719 = vsel %vm162, %v717, %v718
  %v720 = vsel %vm162, %v718, %v717
  %v721 = vsel %vm539, %v719, 0.0
  %v722 = vsel %vm540, %v720, 0.0
  %725 = vrot.lane.b32.xlu0 %v709, 64
  %v726 = vpop.permute.xlu0 %725
  %727 = vrot.lane.b32.xlu0 %v710, 64
  %v728 = vpop.permute.xlu0 %727
  %v731 = vsel %vm195, %v715, %v726
  %v732 = vsel %vm195, %v716, %v728
  %v733 = vld [vmem:[%s7] sm:$0xff]
  %v734 = vld [vmem:[%s7 + $0x8] sm:$0xff]
  %v735 = vld [vmem:[%s7 + $0x10] sm:$0xff]
  %v736 = vld [vmem:[%s7 + $0x18] sm:$0xff]
  %v737 = vld [vmem:[%s7 + $0x20] sm:$0xff]
  %v738 = vld [vmem:[%s7 + $0x28] sm:$0xff]
  %v739 = vld [vmem:[%s7 + $0x30] sm:$0xff]
  %v740 = vld [vmem:[%s7 + $0x38] sm:$0xff]
  %v741 = vld [vmem:[%s7 + $0x40] sm:$0xff]
  %v742 = vld [vmem:[%s7 + $0x48] sm:$0xff]
  %v743 = vld [vmem:[%s7 + $0x50] sm:$0xff]
  %v744 = vld [vmem:[%s7 + $0x58] sm:$0xff]
  %v745 = vld [vmem:[%s7 + $0x60] sm:$0xff]
  %v746 = vld [vmem:[%s7 + $0x68] sm:$0xff]
  %v747 = vld [vmem:[%s7 + $0x70] sm:$0xff]
  %v748 = vld [vmem:[%s7 + $0x78] sm:$0xff]
  %v749 = vld [vmem:[%s7 + $0x80] sm:$0xff]
  %v750 = vld [vmem:[%s7 + $0x88] sm:$0xff]
  %v751 = vld [vmem:[%s7 + $0x90] sm:$0xff]
  %v752 = vld [vmem:[%s7 + $0x98] sm:$0xff]
  %v753 = vld [vmem:[%s7 + $0xa0] sm:$0xff]
  %v754 = vld [vmem:[%s7 + $0xa8] sm:$0xff]
  %v755 = vld [vmem:[%s7 + $0xb0] sm:$0xff]
  %v756 = vld [vmem:[%s7 + $0xb8] sm:$0xff]
  %v758 = vsel %vm195, %v721, 0
  %v761 = vsel %vm195, %v722, 0
  %763 = vmatpush.msra.mxu0 %v748
  %764 = vmatpush.msra.mxu0 %v747
  %765 = vmatpush.msra.mxu0 %v746
  %766 = vmatpush.msra.mxu0 %v745
  %767 = vmatpush.msra.mxu0 %v744
  %768 = vmatpush.msra.mxu0 %v743
  %769 = vmatpush.msra.mxu0 %v742
  %770 = vmatpush.msra.mxu0 %v741
  %771 = vmatpush.msra.mxu0 %v740
  %772 = vmatpush.msra.mxu0 %v739
  %773 = vmatpush.msra.mxu0 %v738
  %774 = vmatpush.msra.mxu0 %v737
  %775 = vmatpush.msra.mxu0 %v736
  %776 = vmatpush.msra.mxu0 %v735
  %777 = vmatpush.msra.mxu0 %v734
  %778 = vmatpush.msra.mxu0 %v733
  %779 = vmatmul.f32.gmra.mxu0 %v731
  %v780 = vpop.f32.mrf.mxu0
  %v781 = vadd.f32 0.0, %v780
  %782 = vmatmul.f32.gmra.mxu0 %v732
  %v783 = vpop.f32.mrf.mxu0
  %v784 = vadd.f32 0.0, %v783
  %785 = vdwg.mxu0
  %786 = vmatpush.msra.mxu0 0.0
  %787 = vmatpush.msra.mxu0 0.0
  %788 = vmatpush.msra.mxu0 0.0
  %789 = vmatpush.msra.mxu0 0.0
  %790 = vmatpush.msra.mxu0 0.0
  %791 = vmatpush.msra.mxu0 0.0
  %792 = vmatpush.msra.mxu0 0.0
  %793 = vmatpush.msra.mxu0 0.0
  %794 = vmatpush.msra.mxu0 %v756
  %795 = vmatpush.msra.mxu0 %v755
  %796 = vmatpush.msra.mxu0 %v754
  %797 = vmatpush.msra.mxu0 %v753
  %798 = vmatpush.msra.mxu0 %v752
  %799 = vmatpush.msra.mxu0 %v751
  %800 = vmatpush.msra.mxu0 %v750
  %801 = vmatpush.msra.mxu0 %v749
  %802 = vmatmul.f32.gmra.mxu0 %v758
  %v803 = vpop.f32.mrf.mxu0
  %v804 = vadd.f32 %v781, %v803
  %805 = vmatmul.f32.gmra.mxu0 %v761
  %v806 = vpop.f32.mrf.mxu0
  %v807 = vadd.f32 %v784, %v806
  %808 = vdwg.mxu0
  %v809 = vld [vmem:[%s8] sm:$0x1]
  %v810 = vld [vmem:[%s8 + $0x1] sm:$0x1]
  %v811 = vsel %vm195, %v804, 0.0
  %v812 = vsel %vm195, %v807, 0.0
  %v813 = vadd.f32 %v811, %v812
  %v814 = vrot.slane %v813, 4
  %v815 = vadd.f32 %v813, %v814
  %v816 = vrot.slane %v815, 2
  %v817 = vadd.f32 %v815, %v816
  %v818 = vrot.slane %v817, 1
  %v819 = vadd.f32 %v817, %v818
  %v820 = vsel %vm195, %v819, 0.0
  %821 = vrot.lane.b32.xlu0 %v820, 8
  %v822 = vpop.permute.xlu0 %821
  %v823 = vadd.f32 %v820, %v822
  %824 = vrot.lane.b32.xlu0 %v823, 16
  %v825 = vpop.permute.xlu0 %824
  %v826 = vadd.f32 %v823, %v825
  %827 = vrot.lane.b32.xlu0 %v826, 32
  %v828 = vpop.permute.xlu0 %827
  %v829 = vadd.f32 %v826, %v828
  %830 = vrot.lane.b32.xlu0 %v829, 64
  %v831 = vpop.permute.xlu0 %830
  %v832 = vadd.f32 %v829, %v831
  %v833 = vmul.f32 %v804, %v804
  %v834 = vmul.f32 %v807, %v807
  %v835 = vsel %vm195, %v833, 0.0
  %v836 = vsel %vm195, %v834, 0.0
  %v837 = vadd.f32 %v835, %v836
  %v838 = vrot.slane %v837, 4
  %v839 = vadd.f32 %v837, %v838
  %v840 = vrot.slane %v839, 2
  %v841 = vadd.f32 %v839, %v840
  %v842 = vrot.slane %v841, 1
  %v843 = vadd.f32 %v841, %v842
  %v844 = vsel %vm195, %v843, 0.0
  %845 = vrot.lane.b32.xlu0 %v844, 8
  %v846 = vpop.permute.xlu0 %845
  %v847 = vadd.f32 %v844, %v846
  %848 = vrot.lane.b32.xlu0 %v847, 16
  %v849 = vpop.permute.xlu0 %848
  %v850 = vadd.f32 %v847, %v849
  %851 = vrot.lane.b32.xlu0 %v850, 32
  %v852 = vpop.permute.xlu0 %851
  %v853 = vadd.f32 %v850, %v852
  %854 = vrot.lane.b32.xlu0 %v853, 64
  %v855 = vpop.permute.xlu0 %854
  %v856 = vadd.f32 %v853, %v855
  %v857 = vmul.f32 %v832, 0.0078125
  %v858 = vmul.f32 %v856, 0.0078125
  %v859 = vmul.f32 %v857, %v857
  %v860 = vsub.f32 %v858, %v859
  %v861 = vadd.f32 %v860, 1e-05
  %v862 = vrsqrt.pop %v861
  %v863 = vmul.f32 %v862, %v861
  %v864 = vmul.f32 %v863, %v862
  %v865 = vmul.f32 0.5, %v864
  %v866 = vsub.f32 1.5, %v865
  %v867 = vmul.f32 %v862, %v866
  %vm868 = vweird.f32 %v861
  %vm869 = vweird.f32 %v862
  %vm870 = vmor %vm868, %vm869
  %v871 = vsel %vm870, %v862, %v867
  %v872 = vmul.f32 %v871, %v809
  %v873 = vmul.f32 %v857, %v872
  %v874 = vsub.f32 %v810, %v873
  %v875 = vperm.slane %v872, 0
  %v876 = vmul.f32 %v804, %v875
  %v877 = vmul.f32 %v807, %v875
  %v878 = vperm.slane %v874, 0
  %v879 = vadd.f32 %v876, %v878
  %v880 = vadd.f32 %v877, %v878
  %v881 = vadd.f32 %v879, %v508
  %v882 = vadd.f32 %v880, %v511
  %vm883 = vcmp.gt.f32.partialorder %v881, 0.0
  %vm884 = vcmp.gt.f32.partialorder %v882, 0.0
  %v885 = vmul.f32 %v881, 1.442695
  %v886 = vpow.pop %v885
  %v887 = vmul.f32 %v882, 1.442695
  %v888 = vpow.pop %v887
  %v889 = vsub.f32 %v886, 1.0
  %v890 = vsub.f32 %v888, 1.0
  %v891 = vsel %vm883, %v881, %v889
  %v892 = vsel %vm884, %v882, %v890
  %v893 = vrot.slane %v891, 7
  %v894 = vrot.slane %v892, 7
  %v895 = vsel %vm141, %v893, %v894
  %v896 = vsel %vm141, %v894, %v893
  %v897 = vsel %vm529, %v896, 0.0
  %v898 = vsel %vm530, %v895, 0.0
  %v899 = vrot.slane %v891, 1
  %v900 = vrot.slane %v892, 1
  %v901 = vsel %vm162, %v899, %v900
  %v902 = vsel %vm162, %v900, %v899
  %v903 = vsel %vm539, %v901, 0.0
  %v904 = vsel %vm540, %v902, 0.0
  %907 = vrot.lane.b32.xlu0 %v891, 64
  %v908 = vpop.permute.xlu0 %907
  %909 = vrot.lane.b32.xlu0 %v892, 64
  %v910 = vpop.permute.xlu0 %909
  %v913 = vsel %vm195, %v897, %v908
  %v914 = vsel %vm195, %v898, %v910
  %v915 = vld [vmem:[%s9] sm:$0xff]
  %v916 = vld [vmem:[%s9 + $0x8] sm:$0xff]
  %v917 = vld [vmem:[%s9 + $0x10] sm:$0xff]
  %v918 = vld [vmem:[%s9 + $0x18] sm:$0xff]
  %v919 = vld [vmem:[%s9 + $0x20] sm:$0xff]
  %v920 = vld [vmem:[%s9 + $0x28] sm:$0xff]
  %v921 = vld [vmem:[%s9 + $0x30] sm:$0xff]
  %v922 = vld [vmem:[%s9 + $0x38] sm:$0xff]
  %v923 = vld [vmem:[%s9 + $0x40] sm:$0xff]
  %v924 = vld [vmem:[%s9 + $0x48] sm:$0xff]
  %v925 = vld [vmem:[%s9 + $0x50] sm:$0xff]
  %v926 = vld [vmem:[%s9 + $0x58] sm:$0xff]
  %v927 = vld [vmem:[%s9 + $0x60] sm:$0xff]
  %v928 = vld [vmem:[%s9 + $0x68] sm:$0xff]
  %v929 = vld [vmem:[%s9 + $0x70] sm:$0xff]
  %v930 = vld [vmem:[%s9 + $0x78] sm:$0xff]
  %v931 = vld [vmem:[%s9 + $0x80] sm:$0xff]
  %v932 = vld [vmem:[%s9 + $0x88] sm:$0xff]
  %v933 = vld [vmem:[%s9 + $0x90] sm:$0xff]
  %v934 = vld [vmem:[%s9 + $0x98] sm:$0xff]
  %v935 = vld [vmem:[%s9 + $0xa0] sm:$0xff]
  %v936 = vld [vmem:[%s9 + $0xa8] sm:$0xff]
  %v937 = vld [vmem:[%s9 + $0xb0] sm:$0xff]
  %v938 = vld [vmem:[%s9 + $0xb8] sm:$0xff]
  %v940 = vsel %vm195, %v903, 0
  %v943 = vsel %vm195, %v904, 0
  %945 = vmatpush.msra.mxu0 %v930
  %946 = vmatpush.msra.mxu0 %v929
  %947 = vmatpush.msra.mxu0 %v928
  %948 = vmatpush.msra.mxu0 %v927
  %949 = vmatpush.msra.mxu0 %v926
  %950 = vmatpush.msra.mxu0 %v925
  %951 = vmatpush.msra.mxu0 %v924
  %952 = vmatpush.msra.mxu0 %v923
  %953 = vmatpush.msra.mxu0 %v922
  %954 = vmatpush.msra.mxu0 %v921
  %955 = vmatpush.msra.mxu0 %v920
  %956 = vmatpush.msra.mxu0 %v919
  %957 = vmatpush.msra.mxu0 %v918
  %958 = vmatpush.msra.mxu0 %v917
  %959 = vmatpush.msra.mxu0 %v916
  %960 = vmatpush.msra.mxu0 %v915
  %961 = vmatmul.f32.gmra.mxu0 %v913
  %v962 = vpop.f32.mrf.mxu0
  %v963 = vadd.f32 0.0, %v962
  %964 = vmatmul.f32.gmra.mxu0 %v914
  %v965 = vpop.f32.mrf.mxu0
  %v966 = vadd.f32 0.0, %v965
  %967 = vdwg.mxu0
  %968 = vmatpush.msra.mxu0 0.0
  %969 = vmatpush.msra.mxu0 0.0
  %970 = vmatpush.msra.mxu0 0.0
  %971 = vmatpush.msra.mxu0 0.0
  %972 = vmatpush.msra.mxu0 0.0
  %973 = vmatpush.msra.mxu0 0.0
  %974 = vmatpush.msra.mxu0 0.0
  %975 = vmatpush.msra.mxu0 0.0
  %976 = vmatpush.msra.mxu0 %v938
  %977 = vmatpush.msra.mxu0 %v937
  %978 = vmatpush.msra.mxu0 %v936
  %979 = vmatpush.msra.mxu0 %v935
  %980 = vmatpush.msra.mxu0 %v934
  %981 = vmatpush.msra.mxu0 %v933
  %982 = vmatpush.msra.mxu0 %v932
  %983 = vmatpush.msra.mxu0 %v931
  %984 = vmatmul.f32.gmra.mxu0 %v940
  %v985 = vpop.f32.mrf.mxu0
  %v986 = vadd.f32 %v963, %v985
  %987 = vmatmul.f32.gmra.mxu0 %v943
  %v988 = vpop.f32.mrf.mxu0
  %v989 = vadd.f32 %v966, %v988
  %990 = vdwg.mxu0
  %v991 = vld [vmem:[%s10] sm:$0x1]
  %v992 = vld [vmem:[%s10 + $0x1] sm:$0x1]
  %v993 = vsel %vm195, %v986, 0.0
  %v994 = vsel %vm195, %v989, 0.0
  %v995 = vadd.f32 %v993, %v994
  %v996 = vrot.slane %v995, 4
  %v997 = vadd.f32 %v995, %v996
  %v998 = vrot.slane %v997, 2
  %v999 = vadd.f32 %v997, %v998
  %v1000 = vrot.slane %v999, 1
  %v1001 = vadd.f32 %v999, %v1000
  %v1002 = vsel %vm195, %v1001, 0.0
  %1003 = vrot.lane.b32.xlu0 %v1002, 8
  %v1004 = vpop.permute.xlu0 %1003
  %v1005 = vadd.f32 %v1002, %v1004
  %1006 = vrot.lane.b32.xlu0 %v1005, 16
  %v1007 = vpop.permute.xlu0 %1006
  %v1008 = vadd.f32 %v1005, %v1007
  %1009 = vrot.lane.b32.xlu0 %v1008, 32
  %v1010 = vpop.permute.xlu0 %1009
  %v1011 = vadd.f32 %v1008, %v1010
  %1012 = vrot.lane.b32.xlu0 %v1011, 64
  %v1013 = vpop.permute.xlu0 %1012
  %v1014 = vadd.f32 %v1011, %v1013
  %v1015 = vmul.f32 %v986, %v986
  %v1016 = vmul.f32 %v989, %v989
  %v1017 = vsel %vm195, %v1015, 0.0
  %v1018 = vsel %vm195, %v1016, 0.0
  %v1019 = vadd.f32 %v1017, %v1018
  %v1020 = vrot.slane %v1019, 4
  %v1021 = vadd.f32 %v1019, %v1020
  %v1022 = vrot.slane %v1021, 2
  %v1023 = vadd.f32 %v1021, %v1022
  %v1024 = vrot.slane %v1023, 1
  %v1025 = vadd.f32 %v1023, %v1024
  %v1026 = vsel %vm195, %v1025, 0.0
  %1027 = vrot.lane.b32.xlu0 %v1026, 8
  %v1028 = vpop.permute.xlu0 %1027
  %v1029 = vadd.f32 %v1026, %v1028
  %1030 = vrot.lane.b32.xlu0 %v1029, 16
  %v1031 = vpop.permute.xlu0 %1030
  %v1032 = vadd.f32 %v1029, %v1031
  %1033 = vrot.lane.b32.xlu0 %v1032, 32
  %v1034 = vpop.permute.xlu0 %1033
  %v1035 = vadd.f32 %v1032, %v1034
  %1036 = vrot.lane.b32.xlu0 %v1035, 64
  %v1037 = vpop.permute.xlu0 %1036
  %v1038 = vadd.f32 %v1035, %v1037
  %v1039 = vmul.f32 %v1014, 0.0078125
  %v1040 = vmul.f32 %v1038, 0.0078125
  %v1041 = vmul.f32 %v1039, %v1039
  %v1042 = vsub.f32 %v1040, %v1041
  %v1043 = vadd.f32 %v1042, 1e-05
  %v1044 = vrsqrt.pop %v1043
  %v1045 = vmul.f32 %v1044, %v1043
  %v1046 = vmul.f32 %v1045, %v1044
  %v1047 = vmul.f32 0.5, %v1046
  %v1048 = vsub.f32 1.5, %v1047
  %v1049 = vmul.f32 %v1044, %v1048
  %vm1050 = vweird.f32 %v1043
  %vm1051 = vweird.f32 %v1044
  %vm1052 = vmor %vm1050, %vm1051
  %v1053 = vsel %vm1052, %v1044, %v1049
  %v1054 = vmul.f32 %v1053, %v991
  %v1055 = vmul.f32 %v1039, %v1054
  %v1056 = vsub.f32 %v992, %v1055
  %v1057 = vperm.slane %v1054, 0
  %v1058 = vmul.f32 %v986, %v1057
  %v1059 = vmul.f32 %v989, %v1057
  %v1060 = vperm.slane %v1056, 0
  %v1061 = vadd.f32 %v1058, %v1060
  %v1062 = vadd.f32 %v1059, %v1060
  %vm1063 = vcmp.gt.f32.partialorder %v1061, 0.0
  %vm1064 = vcmp.gt.f32.partialorder %v1062, 0.0
  %v1065 = vmul.f32 %v1061, 1.442695
  %v1066 = vpow.pop %v1065
  %v1067 = vmul.f32 %v1062, 1.442695
  %v1068 = vpow.pop %v1067
  %v1069 = vsub.f32 %v1066, 1.0
  %v1070 = vsub.f32 %v1068, 1.0
  %v1071 = vsel %vm1063, %v1061, %v1069
  %v1072 = vsel %vm1064, %v1062, %v1070
  %v1073 = vrot.slane %v1071, 7
  %v1074 = vrot.slane %v1072, 7
  %v1075 = vsel %vm141, %v1073, %v1074
  %v1076 = vsel %vm141, %v1074, %v1073
  %v1077 = vsel %vm529, %v1076, 0.0
  %v1078 = vsel %vm530, %v1075, 0.0
  %v1079 = vrot.slane %v1071, 1
  %v1080 = vrot.slane %v1072, 1
  %v1081 = vsel %vm162, %v1079, %v1080
  %v1082 = vsel %vm162, %v1080, %v1079
  %v1083 = vsel %vm539, %v1081, 0.0
  %v1084 = vsel %vm540, %v1082, 0.0
  %1087 = vrot.lane.b32.xlu0 %v1071, 64
  %v1088 = vpop.permute.xlu0 %1087
  %1089 = vrot.lane.b32.xlu0 %v1072, 64
  %v1090 = vpop.permute.xlu0 %1089
  %v1093 = vsel %vm195, %v1077, %v1088
  %v1094 = vsel %vm195, %v1078, %v1090
  %v1095 = vld [vmem:[%s11] sm:$0xff]
  %v1096 = vld [vmem:[%s11 + $0x8] sm:$0xff]
  %v1097 = vld [vmem:[%s11 + $0x10] sm:$0xff]
  %v1098 = vld [vmem:[%s11 + $0x18] sm:$0xff]
  %v1099 = vld [vmem:[%s11 + $0x20] sm:$0xff]
  %v1100 = vld [vmem:[%s11 + $0x28] sm:$0xff]
  %v1101 = vld [vmem:[%s11 + $0x30] sm:$0xff]
  %v1102 = vld [vmem:[%s11 + $0x38] sm:$0xff]
  %v1103 = vld [vmem:[%s11 + $0x40] sm:$0xff]
  %v1104 = vld [vmem:[%s11 + $0x48] sm:$0xff]
  %v1105 = vld [vmem:[%s11 + $0x50] sm:$0xff]
  %v1106 = vld [vmem:[%s11 + $0x58] sm:$0xff]
  %v1107 = vld [vmem:[%s11 + $0x60] sm:$0xff]
  %v1108 = vld [vmem:[%s11 + $0x68] sm:$0xff]
  %v1109 = vld [vmem:[%s11 + $0x70] sm:$0xff]
  %v1110 = vld [vmem:[%s11 + $0x78] sm:$0xff]
  %v1111 = vld [vmem:[%s11 + $0x80] sm:$0xff]
  %v1112 = vld [vmem:[%s11 + $0x88] sm:$0xff]
  %v1113 = vld [vmem:[%s11 + $0x90] sm:$0xff]
  %v1114 = vld [vmem:[%s11 + $0x98] sm:$0xff]
  %v1115 = vld [vmem:[%s11 + $0xa0] sm:$0xff]
  %v1116 = vld [vmem:[%s11 + $0xa8] sm:$0xff]
  %v1117 = vld [vmem:[%s11 + $0xb0] sm:$0xff]
  %v1118 = vld [vmem:[%s11 + $0xb8] sm:$0xff]
  %v1120 = vsel %vm195, %v1083, 0
  %v1123 = vsel %vm195, %v1084, 0
  %1125 = vmatpush.msra.mxu0 %v1110
  %1126 = vmatpush.msra.mxu0 %v1109
  %1127 = vmatpush.msra.mxu0 %v1108
  %1128 = vmatpush.msra.mxu0 %v1107
  %1129 = vmatpush.msra.mxu0 %v1106
  %1130 = vmatpush.msra.mxu0 %v1105
  %1131 = vmatpush.msra.mxu0 %v1104
  %1132 = vmatpush.msra.mxu0 %v1103
  %1133 = vmatpush.msra.mxu0 %v1102
  %1134 = vmatpush.msra.mxu0 %v1101
  %1135 = vmatpush.msra.mxu0 %v1100
  %1136 = vmatpush.msra.mxu0 %v1099
  %1137 = vmatpush.msra.mxu0 %v1098
  %1138 = vmatpush.msra.mxu0 %v1097
  %1139 = vmatpush.msra.mxu0 %v1096
  %1140 = vmatpush.msra.mxu0 %v1095
  %1141 = vmatmul.f32.gmra.mxu0 %v1093
  %v1142 = vpop.f32.mrf.mxu0
  %v1143 = vadd.f32 0.0, %v1142
  %1144 = vmatmul.f32.gmra.mxu0 %v1094
  %v1145 = vpop.f32.mrf.mxu0
  %v1146 = vadd.f32 0.0, %v1145
  %1147 = vdwg.mxu0
  %1148 = vmatpush.msra.mxu0 0.0
  %1149 = vmatpush.msra.mxu0 0.0
  %1150 = vmatpush.msra.mxu0 0.0
  %1151 = vmatpush.msra.mxu0 0.0
  %1152 = vmatpush.msra.mxu0 0.0
  %1153 = vmatpush.msra.mxu0 0.0
  %1154 = vmatpush.msra.mxu0 0.0
  %1155 = vmatpush.msra.mxu0 0.0
  %1156 = vmatpush.msra.mxu0 %v1118
  %1157 = vmatpush.msra.mxu0 %v1117
  %1158 = vmatpush.msra.mxu0 %v1116
  %1159 = vmatpush.msra.mxu0 %v1115
  %1160 = vmatpush.msra.mxu0 %v1114
  %1161 = vmatpush.msra.mxu0 %v1113
  %1162 = vmatpush.msra.mxu0 %v1112
  %1163 = vmatpush.msra.mxu0 %v1111
  %1164 = vmatmul.f32.gmra.mxu0 %v1120
  %v1165 = vpop.f32.mrf.mxu0
  %v1166 = vadd.f32 %v1143, %v1165
  %1167 = vmatmul.f32.gmra.mxu0 %v1123
  %v1168 = vpop.f32.mrf.mxu0
  %v1169 = vadd.f32 %v1146, %v1168
  %1170 = vdwg.mxu0
  %v1171 = vld [vmem:[%s12] sm:$0x1]
  %v1172 = vld [vmem:[%s12 + $0x1] sm:$0x1]
  %v1173 = vsel %vm195, %v1166, 0.0
  %v1174 = vsel %vm195, %v1169, 0.0
  %v1175 = vadd.f32 %v1173, %v1174
  %v1176 = vrot.slane %v1175, 4
  %v1177 = vadd.f32 %v1175, %v1176
  %v1178 = vrot.slane %v1177, 2
  %v1179 = vadd.f32 %v1177, %v1178
  %v1180 = vrot.slane %v1179, 1
  %v1181 = vadd.f32 %v1179, %v1180
  %v1182 = vsel %vm195, %v1181, 0.0
  %1183 = vrot.lane.b32.xlu0 %v1182, 8
  %v1184 = vpop.permute.xlu0 %1183
  %v1185 = vadd.f32 %v1182, %v1184
  %1186 = vrot.lane.b32.xlu0 %v1185, 16
  %v1187 = vpop.permute.xlu0 %1186
  %v1188 = vadd.f32 %v1185, %v1187
  %1189 = vrot.lane.b32.xlu0 %v1188, 32
  %v1190 = vpop.permute.xlu0 %1189
  %v1191 = vadd.f32 %v1188, %v1190
  %1192 = vrot.lane.b32.xlu0 %v1191, 64
  %v1193 = vpop.permute.xlu0 %1192
  %v1194 = vadd.f32 %v1191, %v1193
  %v1195 = vmul.f32 %v1166, %v1166
  %v1196 = vmul.f32 %v1169, %v1169
  %v1197 = vsel %vm195, %v1195, 0.0
  %v1198 = vsel %vm195, %v1196, 0.0
  %v1199 = vadd.f32 %v1197, %v1198
  %v1200 = vrot.slane %v1199, 4
  %v1201 = vadd.f32 %v1199, %v1200
  %v1202 = vrot.slane %v1201, 2
  %v1203 = vadd.f32 %v1201, %v1202
  %v1204 = vrot.slane %v1203, 1
  %v1205 = vadd.f32 %v1203, %v1204
  %v1206 = vsel %vm195, %v1205, 0.0
  %1207 = vrot.lane.b32.xlu0 %v1206, 8
  %v1208 = vpop.permute.xlu0 %1207
  %v1209 = vadd.f32 %v1206, %v1208
  %1210 = vrot.lane.b32.xlu0 %v1209, 16
  %v1211 = vpop.permute.xlu0 %1210
  %v1212 = vadd.f32 %v1209, %v1211
  %1213 = vrot.lane.b32.xlu0 %v1212, 32
  %v1214 = vpop.permute.xlu0 %1213
  %v1215 = vadd.f32 %v1212, %v1214
  %1216 = vrot.lane.b32.xlu0 %v1215, 64
  %v1217 = vpop.permute.xlu0 %1216
  %v1218 = vadd.f32 %v1215, %v1217
  %v1219 = vmul.f32 %v1194, 0.0078125
  %v1220 = vmul.f32 %v1218, 0.0078125
  %v1221 = vmul.f32 %v1219, %v1219
  %v1222 = vsub.f32 %v1220, %v1221
  %v1223 = vadd.f32 %v1222, 1e-05
  %v1224 = vrsqrt.pop %v1223
  %v1225 = vmul.f32 %v1224, %v1223
  %v1226 = vmul.f32 %v1225, %v1224
  %v1227 = vmul.f32 0.5, %v1226
  %v1228 = vsub.f32 1.5, %v1227
  %v1229 = vmul.f32 %v1224, %v1228
  %vm1230 = vweird.f32 %v1223
  %vm1231 = vweird.f32 %v1224
  %vm1232 = vmor %vm1230, %vm1231
  %v1233 = vsel %vm1232, %v1224, %v1229
  %v1234 = vmul.f32 %v1233, %v1171
  %v1235 = vmul.f32 %v1219, %v1234
  %v1236 = vsub.f32 %v1172, %v1235
  %v1237 = vperm.slane %v1234, 0
  %v1238 = vmul.f32 %v1166, %v1237
  %v1239 = vmul.f32 %v1169, %v1237
  %v1240 = vperm.slane %v1236, 0
  %v1241 = vadd.f32 %v1238, %v1240
  %v1242 = vadd.f32 %v1239, %v1240
  %v1243 = vadd.f32 %v1241, %v881
  %v1244 = vadd.f32 %v1242, %v882
  %1245 = vst.msk [vmem:[%s13] sm:$0xff] %vm195, %v1243
  %1246 = vst.msk [vmem:[%s13 + $0x8] sm:$0xff] %vm195, %v1244
  // Predicated region
  $region54: #{impala_sequential_forward.1} parent=0 // pred_check
    _
  $region55: #{impala_sequential_forward.1} parent=0 // pred_check_branch
    %1248 = sbr.rel (0) target = $region57
  $region56: #{impala_sequential_forward.1} parent=0 // pred_region
    _
  $region57: #{impala_sequential_forward.1} parent=0 // pred_fallthru
    _
  // Predicated region
  $region58: #{impala_sequential_forward.1} parent=0 // pred_check
    _
  $region59: #{impala_sequential_forward.1} parent=0 // pred_check_branch
    %1250 = sbr.rel (0) target = $region61
  $region60: #{impala_sequential_forward.1} parent=0 // pred_region
    _
  $region61: #{impala_sequential_forward.1} parent=0 // pred_fallthru
    _

</llo_original>
